<compile_context>
chip_gen: v7x
topology: tpu7x:2x2x1
jax: 0.10.0
libtpu: 0.0.40
codegen_flags: <defaults>
</compile_context>

<pallas_src>
import functools
import math

import jax
import jax.numpy as jnp
from jax.experimental import pallas as pl


# ----------------------------------------------------------------------------
# Parameter-slab layout helpers (shared between wrapper packing and kernel)
# ----------------------------------------------------------------------------

# rows of the bias/gamma/beta vector slab
R_D_BO, R_D_G, R_D_B = 0, 1, 2
R_T_BO, R_N1_G, R_N1_B = 3, 4, 5
R_N2_G, R_N2_B = 6, 7
R_B1, R_B2 = 8, 9
_VEC_ROWS = 16


def _ru(x, m):
    return (x + m - 1) // m * m


def _slab_cols(E, hid):
    """Column offsets inside the (E, total) weight slab."""
    qkv_w = _ru(3 * E, 128)          # [Wq | Wk | Wv | pad] width per attention
    c_dqkv = 0                       # decoder self-attn fused QKV
    c_tqkv = qkv_w                   # transformer-block fused QKV
    c_w1 = 2 * qkv_w                 # FF W1^T  (E, hid)
    c_w2 = c_w1 + hid                # FF W2    (E, hid)  (used via contract-last)
    c_dwo = c_w2 + hid               # decoder Wo^T (E, E)
    c_two = c_dwo + E                # transformer-block Wo^T (E, E)
    total = _ru(c_two + E, 128)
    return qkv_w, c_dqkv, c_tqkv, c_w1, c_w2, c_dwo, c_two, total


# ----------------------------------------------------------------------------
# Fused kernel: whole DecoderBlock, whole batch, single invocation (no grid)
# ----------------------------------------------------------------------------

def _decoder_block_kernel(x_ref, val_ref, key_ref, trg_bias_ref, src_bias_ref,
                          w_ref, vec_ref, out_ref, *, heads, hid, eps):
    NL, E = out_ref.shape                      # NL = N * L (batch folded in)
    D = E // heads
    qkv_w, _, c_tqkv, c_w1, c_w2, c_dwo, c_two, _ = _slab_cols(E, hid)

    def vrow(r, width):
        # (1, width) row of the vector slab; broadcasts over NL rows
        return vec_ref[r:r + 1, 0:width]

    def attention(q, k, v, bias, wo, bo):
        # q, k, v: (NL, E) heads-on-lanes.  bias: (NL, NL) additive, already
        # block-diagonal over batch (cross-batch / masked entries = -1e20).
        logits = []
        for h in range(heads):                               # static unroll
            s = slice(h * D, (h + 1) * D)
            lg = jax.lax.dot_general(                        # q_h @ k_h^T, no .T
                q[:, s], k[:, s], (((1,), (1,)), ((), ())),
                preferred_element_type=jnp.float32)          # (NL, NL)
            logits.append(lg + bias)
        p = jnp.concatenate(logits, axis=0)                  # (H*NL, NL)
        m = jnp.max(p, axis=-1, keepdims=True)               # ONE softmax pass
        p = jnp.exp(p - m)
        p = p * pl.reciprocal(jnp.sum(p, axis=-1, keepdims=True))
        ctx = [jnp.dot(p[h * NL:(h + 1) * NL, :], v[:, h * D:(h + 1) * D],
                       preferred_element_type=jnp.float32)
               for h in range(heads)]                        # per-head PV dots
        ctx = jnp.concatenate(ctx, axis=-1)                  # (NL, E) in vregs
        return jnp.dot(ctx, wo, preferred_element_type=jnp.float32) + bo

    def add_ln(a, b, gamma, beta):
        t = a + b
        mu = jnp.mean(t, axis=-1, keepdims=True)
        tc = t - mu
        var = jnp.mean(tc * tc, axis=-1, keepdims=True)
        return tc * jax.lax.rsqrt(var + eps) * gamma + beta

    x2 = x_ref[...]                                          # (NL, E)
    k2 = key_ref[...]
    v2 = val_ref[...]
    trg_bias = trg_bias_ref[...]                             # (NL, NL)
    src_bias = src_bias_ref[...]                             # (NL, NL)

    # ---- ONE fused projection matmul: [x; key; value] @ [d_wqkv | t_wqkv] ---
    stacked = jnp.concatenate([x2, k2, v2], axis=0)          # (3*NL, E)
    proj = jnp.dot(stacked, w_ref[:, 0:c_w1],
                   preferred_element_type=jnp.float32)       # (3*NL, 2*qkv_w)
    dq = proj[0:NL, 0:E]                                     # x @ Wq_dec*scale
    dk = proj[0:NL, E:2 * E]                                 # x @ Wk_dec
    dv = proj[0:NL, 2 * E:3 * E]                             # x @ Wv_dec
    tk = proj[NL:2 * NL, qkv_w + E:qkv_w + 2 * E]            # key   @ Wk_tb
    tv = proj[2 * NL:3 * NL, qkv_w + 2 * E:qkv_w + 3 * E]    # value @ Wv_tb

    # ---- DecoderBlock: self-attention + add & norm (dropout = identity) -----
    attn1 = attention(dq, dk, dv, trg_bias,
                      w_ref[:, c_dwo:c_dwo + E], vrow(R_D_BO, E))
    query = add_ln(attn1, x2, vrow(R_D_G, E), vrow(R_D_B, E))

    # ---- TransformerBlock: cross-attention + add & norm ---------------------
    tq = jnp.dot(query, w_ref[:, c_tqkv:c_tqkv + E],
                 preferred_element_type=jnp.float32)         # query @ Wq_tb*scale
    attn2 = attention(tq, tk, tv, src_bias,
                      w_ref[:, c_two:c_two + E], vrow(R_T_BO, E))
    xx = add_ln(attn2, query, vrow(R_N1_G, E), vrow(R_N1_B, E))

    # ---- feed-forward (hidden dim = hid is lane-dense) ----------------------
    h1 = jnp.maximum(
        jnp.dot(xx, w_ref[:, c_w1:c_w1 + hid],
                preferred_element_type=jnp.float32) + vrow(R_B1, hid), 0.0)
    ff = jax.lax.dot_general(                                # h1 @ W2^T, no .T
        h1, w_ref[:, c_w2:c_w2 + hid], (((1,), (1,)), ((), ())),
        preferred_element_type=jnp.float32) + vrow(R_B2, E)

    out_ref[...] = add_ln(ff, xx, vrow(R_N2_G, E), vrow(R_N2_B, E))


# ----------------------------------------------------------------------------
# Wrapper: parameter slabs, block-diagonal mask bias, single pallas_call
# ----------------------------------------------------------------------------

def _pack_params(params, E, hid):
    """Pack all weights into one (E, total) slab and all vectors into one slab."""
    _, c_dqkv, c_tqkv, c_w1, c_w2, c_dwo, c_two, total = _slab_cols(E, hid)
    da, ta, ff = params["dec_attn"], params["tb_attn"], params["tb_ff"]

    W = jnp.zeros((E, total), jnp.float32)
    W = W.at[:, c_dqkv:c_dqkv + E].set(da["wq_bd"])          # scale folded in
    W = W.at[:, c_dqkv + E:c_dqkv + 2 * E].set(da["wk_bd"])
    W = W.at[:, c_dqkv + 2 * E:c_dqkv + 3 * E].set(da["wv_bd"])
    W = W.at[:, c_tqkv:c_tqkv + E].set(ta["wq_bd"])
    W = W.at[:, c_tqkv + E:c_tqkv + 2 * E].set(ta["wk_bd"])
    W = W.at[:, c_tqkv + 2 * E:c_tqkv + 3 * E].set(ta["wv_bd"])
    W = W.at[:, c_w1:c_w1 + hid].set(ff["w1T"])              # (E, hid)
    W = W.at[:, c_w2:c_w2 + hid].set(ff["w2T"].T)            # W2 stored (E, hid)
    W = W.at[:, c_dwo:c_dwo + E].set(da["woT"])
    W = W.at[:, c_two:c_two + E].set(ta["woT"])

    vw = _ru(max(E, hid), 128)
    V = jnp.zeros((_VEC_ROWS, vw), jnp.float32)
    V = V.at[R_D_BO, 0:E].set(da["bo"])
    V = V.at[R_D_G, 0:E].set(params["dec_norm"]["gamma"])
    V = V.at[R_D_B, 0:E].set(params["dec_norm"]["beta"])
    V = V.at[R_T_BO, 0:E].set(ta["bo"])
    V = V.at[R_N1_G, 0:E].set(params["tb_norm1"]["gamma"])
    V = V.at[R_N1_B, 0:E].set(params["tb_norm1"]["beta"])
    V = V.at[R_N2_G, 0:E].set(params["tb_norm2"]["gamma"])
    V = V.at[R_N2_B, 0:E].set(params["tb_norm2"]["beta"])
    V = V.at[R_B1, 0:hid].set(ff["b1"])
    V = V.at[R_B2, 0:E].set(ff["b2"])
    return W, V


def _block_diag_bias(mask):
    """(N, Lq, Lk) mask -> (N*Lq, N*Lk) additive bias.

    0 where attention is allowed (same batch AND mask != 0), -1e20 elsewhere
    (masked positions and all cross-batch positions)."""
    N, Lq, Lk = mask.shape
    allow = (mask != 0.0).astype(jnp.float32)
    eye = jnp.eye(N, dtype=jnp.float32)
    bd = jnp.einsum("nqk,nm->nqmk", allow, eye).reshape(N * Lq, N * Lk)
    return jnp.where(bd > 0.5, jnp.float32(0.0), jnp.float32(-1e20))


def decoder_block_forward(x, value, key, src_mask, trg_mask, params):
    """DecoderBlock.forward(x, value, key, src_mask, trg_mask) — fully fused."""
    N, L, E = x.shape
    H = params["dec_attn"]["heads"]
    hid = params["tb_ff"]["w1T"].shape[1]

    W, V = _pack_params(params, E, hid)
    trg_bias = _block_diag_bias(trg_mask)        # (N*L, N*L)
    src_bias = _block_diag_bias(src_mask)        # (N*L, N*L)

    # Contiguity-preserving (free) reshape so the kernel sees flat (N*L, E).
    x2 = x.reshape(N * L, E)
    v2 = value.reshape(N * L, E)
    k2 = key.reshape(N * L, E)

    kern = functools.partial(_decoder_block_kernel, heads=H, hid=hid, eps=1e-5)

    out2 = pl.pallas_call(
        kern,
        out_shape=jax.ShapeDtypeStruct((N * L, E), jnp.float32),
        # No grid, no BlockSpecs: all 7 operands are placed whole in VMEM
        # (total working set ~130 KiB), single kernel invocation, no scratch.
    )(x2, v2, k2, trg_bias, src_bias, W, V)

    return out2.reshape(N, L, E)


# ----------------------------------------------------------------------------
# Parameter init (deterministic, synthetic)
# ----------------------------------------------------------------------------

def init_attention_params(key, embed_size, heads):
    D = embed_size // heads
    k1, k2, k3, k4, k5 = jax.random.split(key, 5)
    wq = jax.random.normal(k1, (D, D), jnp.float32) * 0.1    # nn.Linear (out,in)
    wk = jax.random.normal(k2, (D, D), jnp.float32) * 0.1
    wv = jax.random.normal(k3, (D, D), jnp.float32) * 0.1
    wo = jax.random.normal(k4, (embed_size, embed_size), jnp.float32) * 0.1
    bo = jax.random.normal(k5, (embed_size,), jnp.float32) * 0.1
    eye = jnp.eye(heads, dtype=jnp.float32)
    scale = 1.0 / math.sqrt(embed_size)
    return {
        "heads": heads,
        # raw per-head weights (for the pure-JAX reference)
        "wqT": wq.T, "wkT": wk.T, "wvT": wv.T,
        # kernel path: block-diagonal E-wide projections; softmax scale folded
        # into Wq (NOT into the -1e20 mask bias).
        "wq_bd": jnp.kron(eye, wq.T) * scale,
        "wk_bd": jnp.kron(eye, wk.T),
        "wv_bd": jnp.kron(eye, wv.T),
        # fc_out: y = x @ Wo.T + bo (heads already concatenated along E)
        "woT": wo.T,
        "bo": bo,
    }


def init_ln_params(embed_size):
    return {"gamma": jnp.ones((embed_size,), jnp.float32),
            "beta": jnp.zeros((embed_size,), jnp.float32)}


def init_ff_params(key, embed_size, forward_expansion):
    hid = forward_expansion * embed_size
    k1, k2, k3, k4 = jax.random.split(key, 4)
    w1 = jax.random.normal(k1, (hid, embed_size), jnp.float32) * 0.1
    b1 = jax.random.normal(k2, (hid,), jnp.float32) * 0.1
    w2 = jax.random.normal(k3, (embed_size, hid), jnp.float32) * 0.1
    b2 = jax.random.normal(k4, (embed_size,), jnp.float32) * 0.1
    return {"w1T": w1.T, "b1": b1, "w2T": w2.T, "b2": b2}


# ----------------------------------------------------------------------------
# Pure-JAX reference (PyTorch-exact math, independent of kernel tricks)
# ----------------------------------------------------------------------------

def ref_self_attention(values, keys, query, mask, p):
    N, Lq, E = query.shape
    H = p["heads"]
    D = E // H
    Lk = keys.shape[1]
    v = jnp.einsum("nlhd,de->nlhe", values.reshape(N, Lk, H, D), p["wvT"])
    k = jnp.einsum("nlhd,de->nlhe", keys.reshape(N, Lk, H, D), p["wkT"])
    q = jnp.einsum("nlhd,de->nlhe", query.reshape(N, Lq, H, D), p["wqT"])
    energy = jnp.einsum("nqhd,nkhd->nhqk", q, k)
    energy = jnp.where(mask[:, None, :, :] == 0.0, jnp.float32(-1e20), energy)
    att = jax.nn.softmax(energy / math.sqrt(E), axis=3)
    out = jnp.einsum("nhqk,nkhd->nqhd", att, v).reshape(N, Lq, E)
    return out @ p["woT"] + p["bo"]


def ref_add_ln(a, b, p):
    x = a + b
    mean = jnp.mean(x, axis=-1, keepdims=True)
    var = jnp.mean((x - mean) ** 2, axis=-1, keepdims=True)
    return (x - mean) * jax.lax.rsqrt(var + 1e-5) * p["gamma"] + p["beta"]


def ref_ff(x, p):
    h = jnp.maximum(x @ p["w1T"] + p["b1"], 0.0)
    return h @ p["w2T"] + p["b2"]


def ref_decoder_block(x, value, key, src_mask, trg_mask, params):
    attn1 = ref_self_attention(x, x, x, trg_mask, params["dec_attn"])
    query = ref_add_ln(attn1, x, params["dec_norm"])
    attn2 = ref_self_attention(value, key, query, src_mask, params["tb_attn"])
    xq = ref_add_ln(attn2, query, params["tb_norm1"])
    ff = ref_ff(xq, params["tb_ff"])
    return ref_add_ln(ff, xq, params["tb_norm2"])


# ----------------------------------------------------------------------------
# Main
# ----------------------------------------------------------------------------

if __name__ == "__main__":
    N, L, E, H, FE = 2, 8, 32, 4, 4   # batch, seq, embed, heads, forward_expansion

    root = jax.random.PRNGKey(0)
    kx, kv, kk, k1, k2, k3 = jax.random.split(root, 6)

    x = jax.random.normal(kx, (N, L, E), jnp.float32)
    value = jax.random.normal(kv, (N, L, E), jnp.float32)
    keyt = jax.random.normal(kk, (N, L, E), jnp.float32)

    # trg_mask: causal (lower-triangular), same for every batch element
    trg_mask = jnp.broadcast_to(jnp.tril(jnp.ones((L, L), jnp.float32)), (N, L, L))
    # src_mask: padding mask over keys (batch 0 full, batch 1 sees 6 valid keys)
    key_valid = jnp.stack([jnp.ones((L,), jnp.float32),
                           (jnp.arange(L) < 6).astype(jnp.float32)], axis=0)  # (N, L)
    src_mask = jnp.broadcast_to(key_valid[:, None, :], (N, L, L))

    params = {
        "dec_attn": init_attention_params(k1, E, H),
        "dec_norm": init_ln_params(E),
        "tb_attn": init_attention_params(k2, E, H),
        "tb_norm1": init_ln_params(E),
        "tb_norm2": init_ln_params(E),
        "tb_ff": init_ff_params(k3, E, FE),
    }

    out = decoder_block_forward(x, value, keyt, src_mask, trg_mask, params)
    out = jax.block_until_ready(out)

    ref = ref_decoder_block(x, value, keyt, src_mask, trg_mask, params)
    assert out.shape == (N, L, E)
    assert jnp.allclose(out, ref, atol=1e-4, rtol=1e-4), (
        f"max abs diff {jnp.max(jnp.abs(out - ref))}")

    print("KERNEL_OK")
</pallas_src>

<mosaic_0001>
module attributes {stable_mosaic.version = 11 : i64} {
  func.func @_decoder_block_kernel(%arg0: memref<16x32xf32, #tpu.memory_space<vmem>>, %arg1: memref<16x32xf32, #tpu.memory_space<vmem>>, %arg2: memref<16x32xf32, #tpu.memory_space<vmem>>, %arg3: memref<16x16xf32, #tpu.memory_space<vmem>>, %arg4: memref<16x16xf32, #tpu.memory_space<vmem>>, %arg5: memref<32x640xf32, #tpu.memory_space<vmem>>, %arg6: memref<16x128xf32, #tpu.memory_space<vmem>>, %arg7: memref<16x32xf32, #tpu.memory_space<vmem>>) attributes {dimension_semantics = [], scalar_prefetch = 0 : i64, scratch_operands = 0 : i64, tpu.core_type = #tpu.core_type<tc>} {
    %c0 = arith.constant 0 : index
    %c0_0 = arith.constant 0 : index
    %0 = vector.load %arg0[%c0, %c0_0] : memref<16x32xf32, #tpu.memory_space<vmem>>, vector<16x32xf32>
    %c0_1 = arith.constant 0 : index
    %c0_2 = arith.constant 0 : index
    %1 = vector.load %arg2[%c0_1, %c0_2] : memref<16x32xf32, #tpu.memory_space<vmem>>, vector<16x32xf32>
    %c0_3 = arith.constant 0 : index
    %c0_4 = arith.constant 0 : index
    %2 = vector.load %arg1[%c0_3, %c0_4] : memref<16x32xf32, #tpu.memory_space<vmem>>, vector<16x32xf32>
    %c0_5 = arith.constant 0 : index
    %c0_6 = arith.constant 0 : index
    %3 = vector.load %arg3[%c0_5, %c0_6] : memref<16x16xf32, #tpu.memory_space<vmem>>, vector<16x16xf32>
    %c0_7 = arith.constant 0 : index
    %c0_8 = arith.constant 0 : index
    %4 = vector.load %arg4[%c0_7, %c0_8] : memref<16x16xf32, #tpu.memory_space<vmem>>, vector<16x16xf32>
    %5 = tpu.concatenate %0, %1, %2 in 0 : vector<16x32xf32>, vector<16x32xf32>, vector<16x32xf32> -> vector<48x32xf32>
    %c0_9 = arith.constant 0 : index
    %c0_10 = arith.constant 0 : index
    %6 = vector.load %arg5[%c0_9, %c0_10] : memref<32x640xf32, #tpu.memory_space<vmem>>, vector<32x256xf32>
    %cst = arith.constant dense<0.000000e+00> : vector<48x256xf32>
    %7 = tpu.matmul %5, %6, %cst {dimension_numbers = #tpu.dot_dimension_numbers<[1], [0], [0], [1], [0, 0, 1, 1], [], []>} : vector<48x32xf32>, vector<32x256xf32>, vector<48x256xf32> -> vector<48x256xf32>
    %8 = vector.extract_strided_slice %7 {offsets = [0, 0], sizes = [16, 32], strides = [1, 1]} : vector<48x256xf32> to vector<16x32xf32>
    %9 = vector.extract_strided_slice %7 {offsets = [0, 32], sizes = [16, 32], strides = [1, 1]} : vector<48x256xf32> to vector<16x32xf32>
    %10 = vector.extract_strided_slice %7 {offsets = [0, 64], sizes = [16, 32], strides = [1, 1]} : vector<48x256xf32> to vector<16x32xf32>
    %11 = vector.extract_strided_slice %7 {offsets = [16, 160], sizes = [16, 32], strides = [1, 1]} : vector<48x256xf32> to vector<16x32xf32>
    %12 = vector.extract_strided_slice %7 {offsets = [32, 192], sizes = [16, 32], strides = [1, 1]} : vector<48x256xf32> to vector<16x32xf32>
    %c0_11 = arith.constant 0 : index
    %c512 = arith.constant 512 : index
    %13 = vector.load %arg5[%c0_11, %c512] : memref<32x640xf32, #tpu.memory_space<vmem>>, vector<32x32xf32>
    %c0_12 = arith.constant 0 : index
    %c0_13 = arith.constant 0 : index
    %14 = vector.load %arg6[%c0_12, %c0_13] : memref<16x128xf32, #tpu.memory_space<vmem>>, vector<1x32xf32>
    %15 = vector.extract_strided_slice %8 {offsets = [0, 0], sizes = [16, 8], strides = [1, 1]} : vector<16x32xf32> to vector<16x8xf32>
    %16 = vector.extract_strided_slice %9 {offsets = [0, 0], sizes = [16, 8], strides = [1, 1]} : vector<16x32xf32> to vector<16x8xf32>
    %cst_14 = arith.constant dense<0.000000e+00> : vector<16x16xf32>
    %17 = tpu.matmul %15, %16, %cst_14 {dimension_numbers = #tpu.dot_dimension_numbers<[1], [1], [0], [0], [0, 0, 1, 0], [], []>} : vector<16x8xf32>, vector<16x8xf32>, vector<16x16xf32> -> vector<16x16xf32>
    %18 = arith.addf %17, %3 : vector<16x16xf32>
    %19 = vector.extract_strided_slice %8 {offsets = [0, 8], sizes = [16, 8], strides = [1, 1]} : vector<16x32xf32> to vector<16x8xf32>
    %20 = vector.extract_strided_slice %9 {offsets = [0, 8], sizes = [16, 8], strides = [1, 1]} : vector<16x32xf32> to vector<16x8xf32>
    %cst_15 = arith.constant dense<0.000000e+00> : vector<16x16xf32>
    %21 = tpu.matmul %19, %20, %cst_15 {dimension_numbers = #tpu.dot_dimension_numbers<[1], [1], [0], [0], [0, 0, 1, 0], [], []>} : vector<16x8xf32>, vector<16x8xf32>, vector<16x16xf32> -> vector<16x16xf32>
    %22 = arith.addf %21, %3 : vector<16x16xf32>
    %23 = vector.extract_strided_slice %8 {offsets = [0, 16], sizes = [16, 8], strides = [1, 1]} : vector<16x32xf32> to vector<16x8xf32>
    %24 = vector.extract_strided_slice %9 {offsets = [0, 16], sizes = [16, 8], strides = [1, 1]} : vector<16x32xf32> to vector<16x8xf32>
    %cst_16 = arith.constant dense<0.000000e+00> : vector<16x16xf32>
    %25 = tpu.matmul %23, %24, %cst_16 {dimension_numbers = #tpu.dot_dimension_numbers<[1], [1], [0], [0], [0, 0, 1, 0], [], []>} : vector<16x8xf32>, vector<16x8xf32>, vector<16x16xf32> -> vector<16x16xf32>
    %26 = arith.addf %25, %3 : vector<16x16xf32>
    %27 = vector.extract_strided_slice %8 {offsets = [0, 24], sizes = [16, 8], strides = [1, 1]} : vector<16x32xf32> to vector<16x8xf32>
    %28 = vector.extract_strided_slice %9 {offsets = [0, 24], sizes = [16, 8], strides = [1, 1]} : vector<16x32xf32> to vector<16x8xf32>
    %cst_17 = arith.constant dense<0.000000e+00> : vector<16x16xf32>
    %29 = tpu.matmul %27, %28, %cst_17 {dimension_numbers = #tpu.dot_dimension_numbers<[1], [1], [0], [0], [0, 0, 1, 0], [], []>} : vector<16x8xf32>, vector<16x8xf32>, vector<16x16xf32> -> vector<16x16xf32>
    %30 = arith.addf %29, %3 : vector<16x16xf32>
    %31 = tpu.concatenate %18, %22, %26, %30 in 0 : vector<16x16xf32>, vector<16x16xf32>, vector<16x16xf32>, vector<16x16xf32> -> vector<64x16xf32>
    %cst_18 = arith.constant dense<0xFF800000> : vector<64xf32>
    %32 = vector.multi_reduction <maximumf>, %31, %cst_18 [1] : vector<64x16xf32> to vector<64xf32>
    %33 = vector.shape_cast %32 : vector<64xf32> to vector<64x1xf32>
    %34 = vector.broadcast %33 : vector<64x1xf32> to vector<64x16xf32>
    %35 = arith.subf %31, %34 : vector<64x16xf32>
    %36 = math.exp %35 : vector<64x16xf32>
    %cst_19 = arith.constant dense<0.000000e+00> : vector<64xf32>
    %37 = vector.multi_reduction <add>, %36, %cst_19 [1] : vector<64x16xf32> to vector<64xf32>
    %38 = vector.shape_cast %37 : vector<64xf32> to vector<64x1xf32>
    %39 = tpu.reciprocal %38 : vector<64x1xf32> -> vector<64x1xf32>
    %40 = vector.broadcast %39 : vector<64x1xf32> to vector<64x16xf32>
    %41 = arith.mulf %36, %40 : vector<64x16xf32>
    %42 = vector.extract_strided_slice %41 {offsets = [0, 0], sizes = [16, 16], strides = [1, 1]} : vector<64x16xf32> to vector<16x16xf32>
    %43 = vector.extract_strided_slice %10 {offsets = [0, 0], sizes = [16, 8], strides = [1, 1]} : vector<16x32xf32> to vector<16x8xf32>
    %cst_20 = arith.constant dense<0.000000e+00> : vector<16x8xf32>
    %44 = tpu.matmul %42, %43, %cst_20 {dimension_numbers = #tpu.dot_dimension_numbers<[1], [0], [0], [1], [0, 0, 1, 1], [], []>} : vector<16x16xf32>, vector<16x8xf32>, vector<16x8xf32> -> vector<16x8xf32>
    %45 = vector.extract_strided_slice %41 {offsets = [16, 0], sizes = [16, 16], strides = [1, 1]} : vector<64x16xf32> to vector<16x16xf32>
    %46 = vector.extract_strided_slice %10 {offsets = [0, 8], sizes = [16, 8], strides = [1, 1]} : vector<16x32xf32> to vector<16x8xf32>
    %cst_21 = arith.constant dense<0.000000e+00> : vector<16x8xf32>
    %47 = tpu.matmul %45, %46, %cst_21 {dimension_numbers = #tpu.dot_dimension_numbers<[1], [0], [0], [1], [0, 0, 1, 1], [], []>} : vector<16x16xf32>, vector<16x8xf32>, vector<16x8xf32> -> vector<16x8xf32>
    %48 = vector.extract_strided_slice %41 {offsets = [32, 0], sizes = [16, 16], strides = [1, 1]} : vector<64x16xf32> to vector<16x16xf32>
    %49 = vector.extract_strided_slice %10 {offsets = [0, 16], sizes = [16, 8], strides = [1, 1]} : vector<16x32xf32> to vector<16x8xf32>
    %cst_22 = arith.constant dense<0.000000e+00> : vector<16x8xf32>
    %50 = tpu.matmul %48, %49, %cst_22 {dimension_numbers = #tpu.dot_dimension_numbers<[1], [0], [0], [1], [0, 0, 1, 1], [], []>} : vector<16x16xf32>, vector<16x8xf32>, vector<16x8xf32> -> vector<16x8xf32>
    %51 = vector.extract_strided_slice %41 {offsets = [48, 0], sizes = [16, 16], strides = [1, 1]} : vector<64x16xf32> to vector<16x16xf32>
    %52 = vector.extract_strided_slice %10 {offsets = [0, 24], sizes = [16, 8], strides = [1, 1]} : vector<16x32xf32> to vector<16x8xf32>
    %cst_23 = arith.constant dense<0.000000e+00> : vector<16x8xf32>
    %53 = tpu.matmul %51, %52, %cst_23 {dimension_numbers = #tpu.dot_dimension_numbers<[1], [0], [0], [1], [0, 0, 1, 1], [], []>} : vector<16x16xf32>, vector<16x8xf32>, vector<16x8xf32> -> vector<16x8xf32>
    %54 = tpu.concatenate %44, %47, %50, %53 in 1 : vector<16x8xf32>, vector<16x8xf32>, vector<16x8xf32>, vector<16x8xf32> -> vector<16x32xf32>
    %cst_24 = arith.constant dense<0.000000e+00> : vector<16x32xf32>
    %55 = tpu.matmul %54, %13, %cst_24 {dimension_numbers = #tpu.dot_dimension_numbers<[1], [0], [0], [1], [0, 0, 1, 1], [], []>} : vector<16x32xf32>, vector<32x32xf32>, vector<16x32xf32> -> vector<16x32xf32>
    %56 = vector.broadcast %14 : vector<1x32xf32> to vector<16x32xf32>
    %57 = arith.addf %55, %56 : vector<16x32xf32>
    %c1 = arith.constant 1 : index
    %c0_25 = arith.constant 0 : index
    %58 = vector.load %arg6[%c1, %c0_25] : memref<16x128xf32, #tpu.memory_space<vmem>>, vector<1x32xf32>
    %c2 = arith.constant 2 : index
    %c0_26 = arith.constant 0 : index
    %59 = vector.load %arg6[%c2, %c0_26] : memref<16x128xf32, #tpu.memory_space<vmem>>, vector<1x32xf32>
    %60 = arith.addf %57, %0 : vector<16x32xf32>
    %cst_27 = arith.constant dense<0.000000e+00> : vector<16xf32>
    %61 = vector.multi_reduction <add>, %60, %cst_27 [1] : vector<16x32xf32> to vector<16xf32>
    %62 = vector.shape_cast %61 : vector<16xf32> to vector<16x1xf32>
    %cst_28 = arith.constant 3.200000e+01 : f32
    %63 = vector.broadcast %cst_28 : f32 to vector<16x1xf32>
    %64 = arith.divf %62, %63 : vector<16x1xf32>
    %65 = vector.broadcast %64 : vector<16x1xf32> to vector<16x32xf32>
    %66 = arith.subf %60, %65 : vector<16x32xf32>
    %67 = arith.mulf %66, %66 : vector<16x32xf32>
    %cst_29 = arith.constant dense<0.000000e+00> : vector<16xf32>
    %68 = vector.multi_reduction <add>, %67, %cst_29 [1] : vector<16x32xf32> to vector<16xf32>
    %69 = vector.shape_cast %68 : vector<16xf32> to vector<16x1xf32>
    %cst_30 = arith.constant 3.200000e+01 : f32
    %70 = vector.broadcast %cst_30 : f32 to vector<16x1xf32>
    %71 = arith.divf %69, %70 : vector<16x1xf32>
    %cst_31 = arith.constant 9.99999974E-6 : f32
    %72 = vector.broadcast %cst_31 : f32 to vector<16x1xf32>
    %73 = arith.addf %71, %72 : vector<16x1xf32>
    %74 = math.rsqrt %73 : vector<16x1xf32>
    %75 = vector.broadcast %74 : vector<16x1xf32> to vector<16x32xf32>
    %76 = arith.mulf %66, %75 : vector<16x32xf32>
    %77 = vector.broadcast %58 : vector<1x32xf32> to vector<16x32xf32>
    %78 = arith.mulf %76, %77 : vector<16x32xf32>
    %79 = vector.broadcast %59 : vector<1x32xf32> to vector<16x32xf32>
    %80 = arith.addf %78, %79 : vector<16x32xf32>
    %c0_32 = arith.constant 0 : index
    %c128 = arith.constant 128 : index
    %81 = vector.load %arg5[%c0_32, %c128] : memref<32x640xf32, #tpu.memory_space<vmem>>, vector<32x32xf32>
    %cst_33 = arith.constant dense<0.000000e+00> : vector<16x32xf32>
    %82 = tpu.matmul %80, %81, %cst_33 {dimension_numbers = #tpu.dot_dimension_numbers<[1], [0], [0], [1], [0, 0, 1, 1], [], []>} : vector<16x32xf32>, vector<32x32xf32>, vector<16x32xf32> -> vector<16x32xf32>
    %c0_34 = arith.constant 0 : index
    %c544 = arith.constant 544 : index
    %83 = vector.load %arg5[%c0_34, %c544] : memref<32x640xf32, #tpu.memory_space<vmem>>, vector<32x32xf32>
    %c3 = arith.constant 3 : index
    %c0_35 = arith.constant 0 : index
    %84 = vector.load %arg6[%c3, %c0_35] : memref<16x128xf32, #tpu.memory_space<vmem>>, vector<1x32xf32>
    %85 = vector.extract_strided_slice %82 {offsets = [0, 0], sizes = [16, 8], strides = [1, 1]} : vector<16x32xf32> to vector<16x8xf32>
    %86 = vector.extract_strided_slice %11 {offsets = [0, 0], sizes = [16, 8], strides = [1, 1]} : vector<16x32xf32> to vector<16x8xf32>
    %cst_36 = arith.constant dense<0.000000e+00> : vector<16x16xf32>
    %87 = tpu.matmul %85, %86, %cst_36 {dimension_numbers = #tpu.dot_dimension_numbers<[1], [1], [0], [0], [0, 0, 1, 0], [], []>} : vector<16x8xf32>, vector<16x8xf32>, vector<16x16xf32> -> vector<16x16xf32>
    %88 = arith.addf %87, %4 : vector<16x16xf32>
    %89 = vector.extract_strided_slice %82 {offsets = [0, 8], sizes = [16, 8], strides = [1, 1]} : vector<16x32xf32> to vector<16x8xf32>
    %90 = vector.extract_strided_slice %11 {offsets = [0, 8], sizes = [16, 8], strides = [1, 1]} : vector<16x32xf32> to vector<16x8xf32>
    %cst_37 = arith.constant dense<0.000000e+00> : vector<16x16xf32>
    %91 = tpu.matmul %89, %90, %cst_37 {dimension_numbers = #tpu.dot_dimension_numbers<[1], [1], [0], [0], [0, 0, 1, 0], [], []>} : vector<16x8xf32>, vector<16x8xf32>, vector<16x16xf32> -> vector<16x16xf32>
    %92 = arith.addf %91, %4 : vector<16x16xf32>
    %93 = vector.extract_strided_slice %82 {offsets = [0, 16], sizes = [16, 8], strides = [1, 1]} : vector<16x32xf32> to vector<16x8xf32>
    %94 = vector.extract_strided_slice %11 {offsets = [0, 16], sizes = [16, 8], strides = [1, 1]} : vector<16x32xf32> to vector<16x8xf32>
    %cst_38 = arith.constant dense<0.000000e+00> : vector<16x16xf32>
    %95 = tpu.matmul %93, %94, %cst_38 {dimension_numbers = #tpu.dot_dimension_numbers<[1], [1], [0], [0], [0, 0, 1, 0], [], []>} : vector<16x8xf32>, vector<16x8xf32>, vector<16x16xf32> -> vector<16x16xf32>
    %96 = arith.addf %95, %4 : vector<16x16xf32>
    %97 = vector.extract_strided_slice %82 {offsets = [0, 24], sizes = [16, 8], strides = [1, 1]} : vector<16x32xf32> to vector<16x8xf32>
    %98 = vector.extract_strided_slice %11 {offsets = [0, 24], sizes = [16, 8], strides = [1, 1]} : vector<16x32xf32> to vector<16x8xf32>
    %cst_39 = arith.constant dense<0.000000e+00> : vector<16x16xf32>
    %99 = tpu.matmul %97, %98, %cst_39 {dimension_numbers = #tpu.dot_dimension_numbers<[1], [1], [0], [0], [0, 0, 1, 0], [], []>} : vector<16x8xf32>, vector<16x8xf32>, vector<16x16xf32> -> vector<16x16xf32>
    %100 = arith.addf %99, %4 : vector<16x16xf32>
    %101 = tpu.concatenate %88, %92, %96, %100 in 0 : vector<16x16xf32>, vector<16x16xf32>, vector<16x16xf32>, vector<16x16xf32> -> vector<64x16xf32>
    %cst_40 = arith.constant dense<0xFF800000> : vector<64xf32>
    %102 = vector.multi_reduction <maximumf>, %101, %cst_40 [1] : vector<64x16xf32> to vector<64xf32>
    %103 = vector.shape_cast %102 : vector<64xf32> to vector<64x1xf32>
    %104 = vector.broadcast %103 : vector<64x1xf32> to vector<64x16xf32>
    %105 = arith.subf %101, %104 : vector<64x16xf32>
    %106 = math.exp %105 : vector<64x16xf32>
    %cst_41 = arith.constant dense<0.000000e+00> : vector<64xf32>
    %107 = vector.multi_reduction <add>, %106, %cst_41 [1] : vector<64x16xf32> to vector<64xf32>
    %108 = vector.shape_cast %107 : vector<64xf32> to vector<64x1xf32>
    %109 = tpu.reciprocal %108 : vector<64x1xf32> -> vector<64x1xf32>
    %110 = vector.broadcast %109 : vector<64x1xf32> to vector<64x16xf32>
    %111 = arith.mulf %106, %110 : vector<64x16xf32>
    %112 = vector.extract_strided_slice %111 {offsets = [0, 0], sizes = [16, 16], strides = [1, 1]} : vector<64x16xf32> to vector<16x16xf32>
    %113 = vector.extract_strided_slice %12 {offsets = [0, 0], sizes = [16, 8], strides = [1, 1]} : vector<16x32xf32> to vector<16x8xf32>
    %cst_42 = arith.constant dense<0.000000e+00> : vector<16x8xf32>
    %114 = tpu.matmul %112, %113, %cst_42 {dimension_numbers = #tpu.dot_dimension_numbers<[1], [0], [0], [1], [0, 0, 1, 1], [], []>} : vector<16x16xf32>, vector<16x8xf32>, vector<16x8xf32> -> vector<16x8xf32>
    %115 = vector.extract_strided_slice %111 {offsets = [16, 0], sizes = [16, 16], strides = [1, 1]} : vector<64x16xf32> to vector<16x16xf32>
    %116 = vector.extract_strided_slice %12 {offsets = [0, 8], sizes = [16, 8], strides = [1, 1]} : vector<16x32xf32> to vector<16x8xf32>
    %cst_43 = arith.constant dense<0.000000e+00> : vector<16x8xf32>
    %117 = tpu.matmul %115, %116, %cst_43 {dimension_numbers = #tpu.dot_dimension_numbers<[1], [0], [0], [1], [0, 0, 1, 1], [], []>} : vector<16x16xf32>, vector<16x8xf32>, vector<16x8xf32> -> vector<16x8xf32>
    %118 = vector.extract_strided_slice %111 {offsets = [32, 0], sizes = [16, 16], strides = [1, 1]} : vector<64x16xf32> to vector<16x16xf32>
    %119 = vector.extract_strided_slice %12 {offsets = [0, 16], sizes = [16, 8], strides = [1, 1]} : vector<16x32xf32> to vector<16x8xf32>
    %cst_44 = arith.constant dense<0.000000e+00> : vector<16x8xf32>
    %120 = tpu.matmul %118, %119, %cst_44 {dimension_numbers = #tpu.dot_dimension_numbers<[1], [0], [0], [1], [0, 0, 1, 1], [], []>} : vector<16x16xf32>, vector<16x8xf32>, vector<16x8xf32> -> vector<16x8xf32>
    %121 = vector.extract_strided_slice %111 {offsets = [48, 0], sizes = [16, 16], strides = [1, 1]} : vector<64x16xf32> to vector<16x16xf32>
    %122 = vector.extract_strided_slice %12 {offsets = [0, 24], sizes = [16, 8], strides = [1, 1]} : vector<16x32xf32> to vector<16x8xf32>
    %cst_45 = arith.constant dense<0.000000e+00> : vector<16x8xf32>
    %123 = tpu.matmul %121, %122, %cst_45 {dimension_numbers = #tpu.dot_dimension_numbers<[1], [0], [0], [1], [0, 0, 1, 1], [], []>} : vector<16x16xf32>, vector<16x8xf32>, vector<16x8xf32> -> vector<16x8xf32>
    %124 = tpu.concatenate %114, %117, %120, %123 in 1 : vector<16x8xf32>, vector<16x8xf32>, vector<16x8xf32>, vector<16x8xf32> -> vector<16x32xf32>
    %cst_46 = arith.constant dense<0.000000e+00> : vector<16x32xf32>
    %125 = tpu.matmul %124, %83, %cst_46 {dimension_numbers = #tpu.dot_dimension_numbers<[1], [0], [0], [1], [0, 0, 1, 1], [], []>} : vector<16x32xf32>, vector<32x32xf32>, vector<16x32xf32> -> vector<16x32xf32>
    %126 = vector.broadcast %84 : vector<1x32xf32> to vector<16x32xf32>
    %127 = arith.addf %125, %126 : vector<16x32xf32>
    %c4 = arith.constant 4 : index
    %c0_47 = arith.constant 0 : index
    %128 = vector.load %arg6[%c4, %c0_47] : memref<16x128xf32, #tpu.memory_space<vmem>>, vector<1x32xf32>
    %c5 = arith.constant 5 : index
    %c0_48 = arith.constant 0 : index
    %129 = vector.load %arg6[%c5, %c0_48] : memref<16x128xf32, #tpu.memory_space<vmem>>, vector<1x32xf32>
    %130 = arith.addf %127, %80 : vector<16x32xf32>
    %cst_49 = arith.constant dense<0.000000e+00> : vector<16xf32>
    %131 = vector.multi_reduction <add>, %130, %cst_49 [1] : vector<16x32xf32> to vector<16xf32>
    %132 = vector.shape_cast %131 : vector<16xf32> to vector<16x1xf32>
    %cst_50 = arith.constant 3.200000e+01 : f32
    %133 = vector.broadcast %cst_50 : f32 to vector<16x1xf32>
    %134 = arith.divf %132, %133 : vector<16x1xf32>
    %135 = vector.broadcast %134 : vector<16x1xf32> to vector<16x32xf32>
    %136 = arith.subf %130, %135 : vector<16x32xf32>
    %137 = arith.mulf %136, %136 : vector<16x32xf32>
    %cst_51 = arith.constant dense<0.000000e+00> : vector<16xf32>
    %138 = vector.multi_reduction <add>, %137, %cst_51 [1] : vector<16x32xf32> to vector<16xf32>
    %139 = vector.shape_cast %138 : vector<16xf32> to vector<16x1xf32>
    %cst_52 = arith.constant 3.200000e+01 : f32
    %140 = vector.broadcast %cst_52 : f32 to vector<16x1xf32>
    %141 = arith.divf %139, %140 : vector<16x1xf32>
    %cst_53 = arith.constant 9.99999974E-6 : f32
    %142 = vector.broadcast %cst_53 : f32 to vector<16x1xf32>
    %143 = arith.addf %141, %142 : vector<16x1xf32>
    %144 = math.rsqrt %143 : vector<16x1xf32>
    %145 = vector.broadcast %144 : vector<16x1xf32> to vector<16x32xf32>
    %146 = arith.mulf %136, %145 : vector<16x32xf32>
    %147 = vector.broadcast %128 : vector<1x32xf32> to vector<16x32xf32>
    %148 = arith.mulf %146, %147 : vector<16x32xf32>
    %149 = vector.broadcast %129 : vector<1x32xf32> to vector<16x32xf32>
    %150 = arith.addf %148, %149 : vector<16x32xf32>
    %c0_54 = arith.constant 0 : index
    %c256 = arith.constant 256 : index
    %151 = vector.load %arg5[%c0_54, %c256] : memref<32x640xf32, #tpu.memory_space<vmem>>, vector<32x128xf32>
    %cst_55 = arith.constant dense<0.000000e+00> : vector<16x128xf32>
    %152 = tpu.matmul %150, %151, %cst_55 {dimension_numbers = #tpu.dot_dimension_numbers<[1], [0], [0], [1], [0, 0, 1, 1], [], []>} : vector<16x32xf32>, vector<32x128xf32>, vector<16x128xf32> -> vector<16x128xf32>
    %c8 = arith.constant 8 : index
    %c0_56 = arith.constant 0 : index
    %153 = vector.load %arg6[%c8, %c0_56] : memref<16x128xf32, #tpu.memory_space<vmem>>, vector<1x128xf32>
    %154 = vector.broadcast %153 : vector<1x128xf32> to vector<16x128xf32>
    %155 = arith.addf %152, %154 : vector<16x128xf32>
    %cst_57 = arith.constant 0.000000e+00 : f32
    %156 = vector.broadcast %cst_57 : f32 to vector<16x128xf32>
    %157 = arith.maximumf %155, %156 : vector<16x128xf32>
    %c0_58 = arith.constant 0 : index
    %c384 = arith.constant 384 : index
    %158 = vector.load %arg5[%c0_58, %c384] : memref<32x640xf32, #tpu.memory_space<vmem>>, vector<32x128xf32>
    %cst_59 = arith.constant dense<0.000000e+00> : vector<16x32xf32>
    %159 = tpu.matmul %157, %158, %cst_59 {dimension_numbers = #tpu.dot_dimension_numbers<[1], [1], [0], [0], [0, 0, 1, 0], [], []>} : vector<16x128xf32>, vector<32x128xf32>, vector<16x32xf32> -> vector<16x32xf32>
    %c9 = arith.constant 9 : index
    %c0_60 = arith.constant 0 : index
    %160 = vector.load %arg6[%c9, %c0_60] : memref<16x128xf32, #tpu.memory_space<vmem>>, vector<1x32xf32>
    %161 = vector.broadcast %160 : vector<1x32xf32> to vector<16x32xf32>
    %162 = arith.addf %159, %161 : vector<16x32xf32>
    %c6 = arith.constant 6 : index
    %c0_61 = arith.constant 0 : index
    %163 = vector.load %arg6[%c6, %c0_61] : memref<16x128xf32, #tpu.memory_space<vmem>>, vector<1x32xf32>
    %c7 = arith.constant 7 : index
    %c0_62 = arith.constant 0 : index
    %164 = vector.load %arg6[%c7, %c0_62] : memref<16x128xf32, #tpu.memory_space<vmem>>, vector<1x32xf32>
    %165 = arith.addf %162, %150 : vector<16x32xf32>
    %cst_63 = arith.constant dense<0.000000e+00> : vector<16xf32>
    %166 = vector.multi_reduction <add>, %165, %cst_63 [1] : vector<16x32xf32> to vector<16xf32>
    %167 = vector.shape_cast %166 : vector<16xf32> to vector<16x1xf32>
    %cst_64 = arith.constant 3.200000e+01 : f32
    %168 = vector.broadcast %cst_64 : f32 to vector<16x1xf32>
    %169 = arith.divf %167, %168 : vector<16x1xf32>
    %170 = vector.broadcast %169 : vector<16x1xf32> to vector<16x32xf32>
    %171 = arith.subf %165, %170 : vector<16x32xf32>
    %172 = arith.mulf %171, %171 : vector<16x32xf32>
    %cst_65 = arith.constant dense<0.000000e+00> : vector<16xf32>
    %173 = vector.multi_reduction <add>, %172, %cst_65 [1] : vector<16x32xf32> to vector<16xf32>
    %174 = vector.shape_cast %173 : vector<16xf32> to vector<16x1xf32>
    %cst_66 = arith.constant 3.200000e+01 : f32
    %175 = vector.broadcast %cst_66 : f32 to vector<16x1xf32>
    %176 = arith.divf %174, %175 : vector<16x1xf32>
    %cst_67 = arith.constant 9.99999974E-6 : f32
    %177 = vector.broadcast %cst_67 : f32 to vector<16x1xf32>
    %178 = arith.addf %176, %177 : vector<16x1xf32>
    %179 = math.rsqrt %178 : vector<16x1xf32>
    %180 = vector.broadcast %179 : vector<16x1xf32> to vector<16x32xf32>
    %181 = arith.mulf %171, %180 : vector<16x32xf32>
    %182 = vector.broadcast %163 : vector<1x32xf32> to vector<16x32xf32>
    %183 = arith.mulf %181, %182 : vector<16x32xf32>
    %184 = vector.broadcast %164 : vector<1x32xf32> to vector<16x32xf32>
    %185 = arith.addf %183, %184 : vector<16x32xf32>
    %c0_68 = arith.constant 0 : index
    %c0_69 = arith.constant 0 : index
    %186 = vector.load %arg7[%c0_68, %c0_69] : memref<16x32xf32, #tpu.memory_space<vmem>>, vector<16x32xf32>
    tpu.vector_store %arg7[%c0_68, %c0_69], %185 {strides = array<i32>} : memref<16x32xf32, #tpu.memory_space<vmem>>, vector<16x32xf32>,
    return
  }
}

</mosaic_0001>

<llo_original>
// kernel: tpu_custom_call.1
$region0: #{tpu_custom_call.1}
  #allocation0 [shape = 'u32[]', space=smem, size = 0x4, offset = 0x4, fixed_abs, tag = 'smem constant byte address 0x4 - core index']
  #allocation1 [shape = 'u32[144,128]{1,0:T(1,128)}', space=vmem, size = 0x12000, scoped, tag = 'internal scratch']
  %s0 = inlined_call_operand.hbm [shape: f32[16,32], index: 0, kind: input, shape index: {}]
  %s1 = inlined_call_operand.hbm [shape: f32[16,32], index: 1, kind: input, shape index: {}]
  %s2 = inlined_call_operand.hbm [shape: f32[16,32], index: 2, kind: input, shape index: {}]
  %s3 = inlined_call_operand.hbm [shape: f32[16,16], index: 3, kind: input, shape index: {}]
  %s4 = inlined_call_operand.hbm [shape: f32[16,16], index: 4, kind: input, shape index: {}]
  %s5 = inlined_call_operand.hbm [shape: f32[32,640], index: 5, kind: input, shape index: {}]
  %s6 = inlined_call_operand.vmem [shape: f32[16,128], index: 6, kind: input, shape index: {}]
  %s7 = inlined_call_operand.hbm [shape: f32[16,32], index: 7, kind: output, shape index: {}]
  %s8 = sld [smem:[#allocation0]]
  $region62: #{tpu_custom_call.1} parent=0
    _
  %s10 = ssub.s32 1, %s8
  %s11 = scalar_select 0, %s10, %s8
  $region1: #{tpu_custom_call.1} parent=0
    #allocation2 [shape = 'u8[8192]{0}', space=vmem, size = 0x2000, scoped, tag = 'input window, operand 0, single buffered']
    #allocation3 [shape = 's32[1]{0}', space=sflag, size = 0x4, scoped, tag = 'scoped memory for tpu_custom_call.1']
    #allocation4 [shape = 's32[1]{0}', space=sflag, size = 0x4, scoped, tag = 'scoped memory for tpu_custom_call.1']
    #allocation5 [shape = 'u8[8192]{0}', space=vmem, size = 0x2000, scoped, tag = 'input window, operand 1, single buffered']
    #allocation6 [shape = 's32[1]{0}', space=sflag, size = 0x4, scoped, tag = 'scoped memory for tpu_custom_call.1']
    #allocation7 [shape = 'u8[8192]{0}', space=vmem, size = 0x2000, scoped, tag = 'input window, operand 2, single buffered']
    #allocation8 [shape = 'u8[8192]{0}', space=vmem, size = 0x2000, scoped, tag = 'input window, operand 3, single buffered']
    #allocation9 [shape = 's32[1]{0}', space=sflag, size = 0x4, scoped, tag = 'scoped memory for tpu_custom_call.1']
    #allocation10 [shape = 'u8[8192]{0}', space=vmem, size = 0x2000, scoped, tag = 'input window, operand 4, single buffered']
    #allocation11 [shape = 'u8[81920]{0}', space=vmem, size = 0x14000, scoped, tag = 'input window, operand 5, single buffered']
    #allocation12 [shape = 's32[1]{0}', space=sflag, size = 0x4, scoped, tag = 'scoped memory for tpu_custom_call.1']
    #allocation13 [shape = 'u8[8192]{0}', space=vmem, size = 0x2000, scoped, tag = 'output window, operand 0, single buffered']
    %12 = vsyncpa [#allocation3], 0
    %13 = vsyncpa [#allocation6], 0
    %14 = vsyncpa [#allocation9], 0
    %15 = vsyncpa [#allocation12], 0
    %16 = vsyncpa [#allocation4], 0
    // Predicated region
    $region2: #{tpu_custom_call.1} parent=1 // pred_check
      _
    $region3: #{tpu_custom_call.1} parent=1 // pred_check_branch
      %18 = sbr.rel (0) target = $region5
    $region4: #{tpu_custom_call.1} parent=1 // pred_region
      %s20 = ssub.s32 256, 256
      %21 = vsyncadd [#allocation3], %s20
      %s22 = sshll.u32 [#allocation2], 4
      %s23 = int_to_ptr.vmem [resolvable:$true] %s22
      %28 = dma.hbm_to_vmem [thread:$0]  %s0, 256, %s23, [#allocation3], 128, 128, 8
    $region5: #{tpu_custom_call.1} parent=1 // pred_fallthru
      _
    // Predicated region
    $region6: #{tpu_custom_call.1} parent=1 // pred_check
      _
    $region7: #{tpu_custom_call.1} parent=1 // pred_check_branch
      %30 = sbr.rel (0) target = $region9
    $region8: #{tpu_custom_call.1} parent=1 // pred_region
      %s32 = ssub.s32 256, 256
      %33 = vsyncadd [#allocation6], %s32
      %s34 = sshll.u32 [#allocation5], 4
      %s35 = int_to_ptr.vmem [resolvable:$true] %s34
      %40 = dma.hbm_to_vmem [thread:$0]  %s1, 256, %s35, [#allocation6], 128, 128, 8
    $region9: #{tpu_custom_call.1} parent=1 // pred_fallthru
      _
    // Predicated region
    $region10: #{tpu_custom_call.1} parent=1 // pred_check
      _
    $region11: #{tpu_custom_call.1} parent=1 // pred_check_branch
      %42 = sbr.rel (0) target = $region13
    $region12: #{tpu_custom_call.1} parent=1 // pred_region
      %s44 = ssub.s32 256, 256
      %45 = vsyncadd [#allocation6], %s44
      %s46 = sshll.u32 [#allocation7], 4
      %s47 = int_to_ptr.vmem [resolvable:$true] %s46
      %52 = dma.hbm_to_vmem [thread:$0]  %s2, 256, %s47, [#allocation6], 128, 128, 8
    $region13: #{tpu_custom_call.1} parent=1 // pred_fallthru
      _
    // Predicated region
    $region14: #{tpu_custom_call.1} parent=1 // pred_check
      _
    $region15: #{tpu_custom_call.1} parent=1 // pred_check_branch
      %54 = sbr.rel (0) target = $region17
    $region16: #{tpu_custom_call.1} parent=1 // pred_region
      %s56 = ssub.s32 256, 256
      %57 = vsyncadd [#allocation9], %s56
      %s58 = sshll.u32 [#allocation8], 4
      %s59 = int_to_ptr.vmem [resolvable:$true] %s58
      %64 = dma.hbm_to_vmem [thread:$0]  %s3, 256, %s59, [#allocation9], 128, 128, 8
    $region17: #{tpu_custom_call.1} parent=1 // pred_fallthru
      _
    // Predicated region
    $region18: #{tpu_custom_call.1} parent=1 // pred_check
      _
    $region19: #{tpu_custom_call.1} parent=1 // pred_check_branch
      %66 = sbr.rel (0) target = $region21
    $region20: #{tpu_custom_call.1} parent=1 // pred_region
      %s68 = ssub.s32 256, 256
      %69 = vsyncadd [#allocation9], %s68
      %s70 = sshll.u32 [#allocation10], 4
      %s71 = int_to_ptr.vmem [resolvable:$true] %s70
      %76 = dma.hbm_to_vmem [thread:$0]  %s4, 256, %s71, [#allocation9], 128, 128, 8
    $region21: #{tpu_custom_call.1} parent=1 // pred_fallthru
      _
    // Predicated region
    $region22: #{tpu_custom_call.1} parent=1 // pred_check
      _
    $region23: #{tpu_custom_call.1} parent=1 // pred_check_branch
      %78 = sbr.rel (0) target = $region25
    $region24: #{tpu_custom_call.1} parent=1 // pred_region
      %s80 = ssub.s32 2560, 2560
      %81 = vsyncadd [#allocation12], %s80
      %s82 = sshll.u32 [#allocation11], 4
      %s83 = int_to_ptr.vmem [resolvable:$true] %s82
      %88 = dma.hbm_to_vmem [thread:$0]  %s5, 2560, %s83, [#allocation12], 640, 640, 40
    $region25: #{tpu_custom_call.1} parent=1 // pred_fallthru
      _
    // Predicated region
    $region26: #{tpu_custom_call.1} parent=1 // pred_check
      _
    $region27: #{tpu_custom_call.1} parent=1 // pred_check_branch
      %90 = sbr.rel (0) target = $region29
    $region28: #{tpu_custom_call.1} parent=1 // pred_region
      _
    $region29: #{tpu_custom_call.1} parent=1 // pred_fallthru
      _
    // Predicated region
    $region30: #{tpu_custom_call.1} parent=1 // pred_check
      _
    $region31: #{tpu_custom_call.1} parent=1 // pred_check_branch
      %92 = sbr.rel (0) target = $region33
    $region32: #{tpu_custom_call.1} parent=1 // pred_region
      %93 = dma.done [#allocation3], 256
    $region33: #{tpu_custom_call.1} parent=1 // pred_fallthru
      _
    // Predicated region
    $region34: #{tpu_custom_call.1} parent=1 // pred_check
      _
    $region35: #{tpu_custom_call.1} parent=1 // pred_check_branch
      %95 = sbr.rel (0) target = $region37
    $region36: #{tpu_custom_call.1} parent=1 // pred_region
      %96 = dma.done [#allocation6], 256
    $region37: #{tpu_custom_call.1} parent=1 // pred_fallthru
      _
    // Predicated region
    $region38: #{tpu_custom_call.1} parent=1 // pred_check
      _
    $region39: #{tpu_custom_call.1} parent=1 // pred_check_branch
      %98 = sbr.rel (0) target = $region41
    $region40: #{tpu_custom_call.1} parent=1 // pred_region
      %99 = dma.done [#allocation6], 256
    $region41: #{tpu_custom_call.1} parent=1 // pred_fallthru
      _
    // Predicated region
    $region42: #{tpu_custom_call.1} parent=1 // pred_check
      _
    $region43: #{tpu_custom_call.1} parent=1 // pred_check_branch
      %101 = sbr.rel (0) target = $region45
    $region44: #{tpu_custom_call.1} parent=1 // pred_region
      %102 = dma.done [#allocation9], 256
    $region45: #{tpu_custom_call.1} parent=1 // pred_fallthru
      _
    // Predicated region
    $region46: #{tpu_custom_call.1} parent=1 // pred_check
      _
    $region47: #{tpu_custom_call.1} parent=1 // pred_check_branch
      %104 = sbr.rel (0) target = $region49
    $region48: #{tpu_custom_call.1} parent=1 // pred_region
      %105 = dma.done [#allocation9], 256
    $region49: #{tpu_custom_call.1} parent=1 // pred_fallthru
      _
    // Predicated region
    $region50: #{tpu_custom_call.1} parent=1 // pred_check
      _
    $region51: #{tpu_custom_call.1} parent=1 // pred_check_branch
      %107 = sbr.rel (0) target = $region53
    $region52: #{tpu_custom_call.1} parent=1 // pred_region
      %108 = dma.done [#allocation12], 2560
    $region53: #{tpu_custom_call.1} parent=1 // pred_fallthru
      _
    %v109 = vld [vmem:[#allocation2] sm:$0xff]
    %v110 = vld [vmem:[#allocation2 + $0x8] sm:$0xff]
    %v111 = vld [vmem:[#allocation7] sm:$0xff]
    %v112 = vld [vmem:[#allocation7 + $0x8] sm:$0xff]
    %v113 = vld [vmem:[#allocation5] sm:$0xff]
    %v114 = vld [vmem:[#allocation5 + $0x8] sm:$0xff]
    %v115 = vld [vmem:[#allocation8] sm:$0xff]
    %v116 = vld [vmem:[#allocation8 + $0x8] sm:$0xff]
    %v117 = vld [vmem:[#allocation10] sm:$0xff]
    %v118 = vld [vmem:[#allocation10 + $0x8] sm:$0xff]
    %v119 = vld [vmem:[#allocation11] sm:$0xff]
    %v120 = vld [vmem:[#allocation11 + $0x8] sm:$0xff]
    %v121 = vld [vmem:[#allocation11 + $0x28] sm:$0xff]
    %v122 = vld [vmem:[#allocation11 + $0x30] sm:$0xff]
    %v123 = vld [vmem:[#allocation11 + $0x50] sm:$0xff]
    %v124 = vld [vmem:[#allocation11 + $0x58] sm:$0xff]
    %v125 = vld [vmem:[#allocation11 + $0x78] sm:$0xff]
    %v126 = vld [vmem:[#allocation11 + $0x80] sm:$0xff]
    %vm127 = vcmask 261120
    %v129 = vsel %vm127, %v109, 0
    %v132 = vsel %vm127, %v110, 0
    %v135 = vsel %vm127, %v111, 0
    %v138 = vsel %vm127, %v112, 0
    %v141 = vsel %vm127, %v113, 0
    %v144 = vsel %vm127, %v114, 0
    %146 = vmatprep.subr.mxu0 %v120
    %147 = vmatpush1.msra.mxu0 %v119
    %148 = vmatprep.subr.mxu0 %v122
    %149 = vmatpush1.msra.mxu0 %v121
    %150 = vmatprep.subr.mxu0 %v124
    %151 = vmatpush1.msra.mxu0 %v123
    %152 = vmatprep.subr.mxu0 %v126
    %153 = vmatpush1.msra.mxu0 %v125
    %154 = vmatprep.subr.mxu0 0.0
    %155 = vmatpush1.msra.mxu0 0.0
    %156 = vmatprep.subr.mxu0 0.0
    %157 = vmatpush1.msra.mxu0 0.0
    %158 = vmatprep.subr.mxu0 0.0
    %159 = vmatpush1.msra.mxu0 0.0
    %160 = vmatprep.subr.mxu0 0.0
    %161 = vmatpush1.msra.mxu0 0.0
    %162 = vmatprep.subr.mxu0 0.0
    %163 = vmatpush1.msra.mxu0 0.0
    %164 = vmatprep.subr.mxu0 0.0
    %165 = vmatpush1.msra.mxu0 0.0
    %166 = vmatprep.subr.mxu0 0.0
    %167 = vmatpush1.msra.mxu0 0.0
    %168 = vmatprep.subr.mxu0 0.0
    %169 = vmatpush1.msra.mxu0 0.0
    %170 = vmatprep.subr.mxu0 0.0
    %171 = vmatpush1.msra.mxu0 0.0
    %172 = vmatprep.subr.mxu0 0.0
    %173 = vmatpush1.msra.mxu0 0.0
    %174 = vmatprep.subr.mxu0 0.0
    %175 = vmatpush1.msra.mxu0 0.0
    %176 = vmatprep.subr.mxu0 0.0
    %177 = vmatpush1.msra.mxu0 0.0
    %178 = vmatprep.subr.mxu0 0.0
    %179 = vmatpush1.msra.mxu0 0.0
    %180 = vmatprep.subr.mxu0 0.0
    %181 = vmatpush1.msra.mxu0 0.0
    %182 = vmatprep.subr.mxu0 0.0
    %183 = vmatpush1.msra.mxu0 0.0
    %184 = vmatprep.subr.mxu0 0.0
    %185 = vmatpush1.msra.mxu0 0.0
    %186 = vmatprep.subr.mxu0 0.0
    %187 = vmatpush1.msra.mxu0 0.0
    %188 = vmatprep.subr.mxu0 0.0
    %189 = vmatpush1.msra.mxu0 0.0
    %190 = vmatprep.subr.mxu0 0.0
    %191 = vmatpush1.msra.mxu0 0.0
    %192 = vmatprep.subr.mxu0 0.0
    %193 = vmatpush1.msra.mxu0 0.0
    %194 = vmatprep.subr.mxu0 0.0
    %195 = vmatpush1.msra.mxu0 0.0
    %196 = vmatprep.subr.mxu0 0.0
    %197 = vmatpush1.msra.mxu0 0.0
    %198 = vmatprep.subr.mxu0 0.0
    %199 = vmatpush1.msra.mxu0 0.0
    %200 = vmatprep.subr.mxu0 0.0
    %201 = vmatpush1.msra.mxu0 0.0
    %202 = vmatprep.subr.mxu0 0.0
    %203 = vmatpush1.msra.mxu0 0.0
    %204 = vmatprep.subr.mxu0 0.0
    %205 = vmatpush1.msra.mxu0 0.0
    %206 = vmatprep.subr.mxu0 0.0
    %207 = vmatpush1.msra.mxu0 0.0
    %208 = vmatprep.subr.mxu0 0.0
    %209 = vmatpush1.msra.mxu0 0.0
    %210 = vmatprep.mubr.f32.mxu0 0.0
    %211 = vmatmul.mubr.f32.gmra.mrb[0].mxu0 %v129
    %v212 = vpop.f32.mrb[0].mxu0
    %v213 = vadd.f32 0.0, %v212
    %v214 = vpop.f32.mrb[0].mxu0
    %215 = vmatprep.mubr.f32.mxu0 0.0
    %216 = vmatmul.mubr.f32.gmra.mrb[0].mxu0 %v132
    %v217 = vpop.f32.mrb[0].mxu0
    %v218 = vadd.f32 0.0, %v217
    %v219 = vpop.f32.mrb[0].mxu0
    %220 = vmatprep.mubr.f32.mxu0 0.0
    %221 = vmatmul.mubr.f32.gmra.mrb[0].mxu0 %v135
    %v222 = vpop.f32.mrb[0].mxu0
    %v223 = vpop.f32.mrb[0].mxu0
    %v224 = vadd.f32 0.0, %v223
    %225 = vmatprep.mubr.f32.mxu0 0.0
    %226 = vmatmul.mubr.f32.gmra.mrb[0].mxu0 %v138
    %v227 = vpop.f32.mrb[0].mxu0
    %v228 = vpop.f32.mrb[0].mxu0
    %v229 = vadd.f32 0.0, %v228
    %230 = vmatprep.mubr.f32.mxu0 0.0
    %231 = vmatmul.mubr.f32.gmra.mrb[0].mxu0 %v141
    %v232 = vpop.f32.mrb[0].mxu0
    %v233 = vpop.f32.mrb[0].mxu0
    %v234 = vadd.f32 0.0, %v233
    %235 = vmatprep.mubr.f32.mxu0 0.0
    %236 = vmatmul.mubr.f32.gmra.mrb[0].mxu0 %v144
    %v237 = vpop.f32.mrb[0].mxu0
    %v238 = vpop.f32.mrb[0].mxu0
    %v239 = vadd.f32 0.0, %v238
    %240 = vdwg.mxu0
    %v241 = vld [vmem:[#allocation11 + $0x20] sm:$0xff]
    %v242 = vld [vmem:[#allocation11 + $0x48] sm:$0xff]
    %v243 = vld [vmem:[#allocation11 + $0x70] sm:$0xff]
    %v244 = vld [vmem:[#allocation11 + $0x98] sm:$0xff]
    %v245 = vld [vmem:[%s6] sm:$0x1]
    %248 = vrot.lane.b32.xlu0 %v213, 96
    %v249 = vpop.permute.xlu0 %248
    %250 = vrot.lane.b32.xlu0 %v218, 96
    %v251 = vpop.permute.xlu0 %250
    %vm252 = vcmask 64512
    %v253 = vsel %vm252, %v213, 0
    %v255 = vsel %vm252, %v218, 0
    %v257 = vsel %vm252, %v249, 0
    %v259 = vsel %vm252, %v251, 0
    %261 = vmatprep.subr.mxu0 0.0
    %262 = vmatpush1.xpose.msra.mxu0 %v257
    %263 = vmatprep.subr.mxu0 0.0
    %264 = vmatpush1.xpose.msra.mxu0 %v259
    %265 = vmatprep.subr.mxu0 0.0
    %266 = vmatpush1.xpose.msra.mxu0 0.0
    %267 = vmatprep.subr.mxu0 0.0
    %268 = vmatpush1.xpose.msra.mxu0 0.0
    %269 = vmatprep.subr.mxu0 0.0
    %270 = vmatpush1.xpose.msra.mxu0 0.0
    %271 = vmatprep.subr.mxu0 0.0
    %272 = vmatpush1.xpose.msra.mxu0 0.0
    %273 = vmatprep.subr.mxu0 0.0
    %274 = vmatpush1.xpose.msra.mxu0 0.0
    %275 = vmatprep.subr.mxu0 0.0
    %276 = vmatpush1.xpose.msra.mxu0 0.0
    %277 = vmatprep.subr.mxu0 0.0
    %278 = vmatpush1.xpose.msra.mxu0 0.0
    %279 = vmatprep.subr.mxu0 0.0
    %280 = vmatpush1.xpose.msra.mxu0 0.0
    %281 = vmatprep.subr.mxu0 0.0
    %282 = vmatpush1.xpose.msra.mxu0 0.0
    %283 = vmatprep.subr.mxu0 0.0
    %284 = vmatpush1.xpose.msra.mxu0 0.0
    %285 = vmatprep.subr.mxu0 0.0
    %286 = vmatpush1.xpose.msra.mxu0 0.0
    %287 = vmatprep.subr.mxu0 0.0
    %288 = vmatpush1.xpose.msra.mxu0 0.0
    %289 = vmatprep.subr.mxu0 0.0
    %290 = vmatpush1.xpose.msra.mxu0 0.0
    %291 = vmatprep.subr.mxu0 0.0
    %292 = vmatpush1.xpose.msra.mxu0 0.0
    %293 = vmatprep.subr.mxu0 0.0
    %294 = vmatpush1.xpose.msra.mxu0 0.0
    %295 = vmatprep.subr.mxu0 0.0
    %296 = vmatpush1.xpose.msra.mxu0 0.0
    %297 = vmatprep.subr.mxu0 0.0
    %298 = vmatpush1.xpose.msra.mxu0 0.0
    %299 = vmatprep.subr.mxu0 0.0
    %300 = vmatpush1.xpose.msra.mxu0 0.0
    %301 = vmatprep.subr.mxu0 0.0
    %302 = vmatpush1.xpose.msra.mxu0 0.0
    %303 = vmatprep.subr.mxu0 0.0
    %304 = vmatpush1.xpose.msra.mxu0 0.0
    %305 = vmatprep.subr.mxu0 0.0
    %306 = vmatpush1.xpose.msra.mxu0 0.0
    %307 = vmatprep.subr.mxu0 0.0
    %308 = vmatpush1.xpose.msra.mxu0 0.0
    %309 = vmatprep.subr.mxu0 0.0
    %310 = vmatpush1.xpose.msra.mxu0 0.0
    %311 = vmatprep.subr.mxu0 0.0
    %312 = vmatpush1.xpose.msra.mxu0 0.0
    %313 = vmatprep.subr.mxu0 0.0
    %314 = vmatpush1.xpose.msra.mxu0 0.0
    %315 = vmatprep.subr.mxu0 0.0
    %316 = vmatpush1.xpose.msra.mxu0 0.0
    %317 = vmatprep.subr.mxu0 0.0
    %318 = vmatpush1.xpose.msra.mxu0 0.0
    %319 = vmatprep.subr.mxu0 0.0
    %320 = vmatpush1.xpose.msra.mxu0 0.0
    %321 = vmatprep.subr.mxu0 0.0
    %322 = vmatpush1.xpose.msra.mxu0 0.0
    %323 = vmatprep.subr.mxu0 0.0
    %324 = vmatpush1.xpose.msra.mxu0 0.0
    %325 = vmatprep.mubr.f32.mxu0 0.0
    %326 = vmatmul.mubr.f32.gmra.mrb[0].mxu0 %v253
    %v327 = vpop.f32.mrb[0].mxu0
    %v328 = vadd.f32 %v115, %v327
    %v329 = vpop.f32.mrb[0].mxu0
    %330 = vmatprep.mubr.f32.mxu0 0.0
    %331 = vmatmul.mubr.f32.gmra.mrb[0].mxu0 %v255
    %v332 = vpop.f32.mrb[0].mxu0
    %v333 = vadd.f32 %v116, %v332
    %v334 = vpop.f32.mrb[0].mxu0
    %335 = vdwg.mxu0
    %336 = vrot.lane.b32.xlu0 %v213, 120
    %v337 = vpop.permute.xlu0 %336
    %338 = vrot.lane.b32.xlu0 %v218, 120
    %v339 = vpop.permute.xlu0 %338
    %340 = vrot.lane.b32.xlu0 %v213, 88
    %v341 = vpop.permute.xlu0 %340
    %342 = vrot.lane.b32.xlu0 %v218, 88
    %v343 = vpop.permute.xlu0 %342
    %v344 = vsel %vm252, %v337, 0
    %v346 = vsel %vm252, %v339, 0
    %v348 = vsel %vm252, %v341, 0
    %v350 = vsel %vm252, %v343, 0
    %352 = vmatprep.subr.mxu0 0.0
    %353 = vmatpush1.xpose.msra.mxu0 %v348
    %354 = vmatprep.subr.mxu0 0.0
    %355 = vmatpush1.xpose.msra.mxu0 %v350
    %356 = vmatprep.subr.mxu0 0.0
    %357 = vmatpush1.xpose.msra.mxu0 0.0
    %358 = vmatprep.subr.mxu0 0.0
    %359 = vmatpush1.xpose.msra.mxu0 0.0
    %360 = vmatprep.subr.mxu0 0.0
    %361 = vmatpush1.xpose.msra.mxu0 0.0
    %362 = vmatprep.subr.mxu0 0.0
    %363 = vmatpush1.xpose.msra.mxu0 0.0
    %364 = vmatprep.subr.mxu0 0.0
    %365 = vmatpush1.xpose.msra.mxu0 0.0
    %366 = vmatprep.subr.mxu0 0.0
    %367 = vmatpush1.xpose.msra.mxu0 0.0
    %368 = vmatprep.subr.mxu0 0.0
    %369 = vmatpush1.xpose.msra.mxu0 0.0
    %370 = vmatprep.subr.mxu0 0.0
    %371 = vmatpush1.xpose.msra.mxu0 0.0
    %372 = vmatprep.subr.mxu0 0.0
    %373 = vmatpush1.xpose.msra.mxu0 0.0
    %374 = vmatprep.subr.mxu0 0.0
    %375 = vmatpush1.xpose.msra.mxu0 0.0
    %376 = vmatprep.subr.mxu0 0.0
    %377 = vmatpush1.xpose.msra.mxu0 0.0
    %378 = vmatprep.subr.mxu0 0.0
    %379 = vmatpush1.xpose.msra.mxu0 0.0
    %380 = vmatprep.subr.mxu0 0.0
    %381 = vmatpush1.xpose.msra.mxu0 0.0
    %382 = vmatprep.subr.mxu0 0.0
    %383 = vmatpush1.xpose.msra.mxu0 0.0
    %384 = vmatprep.subr.mxu0 0.0
    %385 = vmatpush1.xpose.msra.mxu0 0.0
    %386 = vmatprep.subr.mxu0 0.0
    %387 = vmatpush1.xpose.msra.mxu0 0.0
    %388 = vmatprep.subr.mxu0 0.0
    %389 = vmatpush1.xpose.msra.mxu0 0.0
    %390 = vmatprep.subr.mxu0 0.0
    %391 = vmatpush1.xpose.msra.mxu0 0.0
    %392 = vmatprep.subr.mxu0 0.0
    %393 = vmatpush1.xpose.msra.mxu0 0.0
    %394 = vmatprep.subr.mxu0 0.0
    %395 = vmatpush1.xpose.msra.mxu0 0.0
    %396 = vmatprep.subr.mxu0 0.0
    %397 = vmatpush1.xpose.msra.mxu0 0.0
    %398 = vmatprep.subr.mxu0 0.0
    %399 = vmatpush1.xpose.msra.mxu0 0.0
    %400 = vmatprep.subr.mxu0 0.0
    %401 = vmatpush1.xpose.msra.mxu0 0.0
    %402 = vmatprep.subr.mxu0 0.0
    %403 = vmatpush1.xpose.msra.mxu0 0.0
    %404 = vmatprep.subr.mxu0 0.0
    %405 = vmatpush1.xpose.msra.mxu0 0.0
    %406 = vmatprep.subr.mxu0 0.0
    %407 = vmatpush1.xpose.msra.mxu0 0.0
    %408 = vmatprep.subr.mxu0 0.0
    %409 = vmatpush1.xpose.msra.mxu0 0.0
    %410 = vmatprep.subr.mxu0 0.0
    %411 = vmatpush1.xpose.msra.mxu0 0.0
    %412 = vmatprep.subr.mxu0 0.0
    %413 = vmatpush1.xpose.msra.mxu0 0.0
    %414 = vmatprep.subr.mxu0 0.0
    %415 = vmatpush1.xpose.msra.mxu0 0.0
    %416 = vmatprep.mubr.f32.mxu0 0.0
    %417 = vmatmul.mubr.f32.gmra.mrb[0].mxu0 %v344
    %v418 = vpop.f32.mrb[0].mxu0
    %v419 = vadd.f32 %v115, %v418
    %v420 = vpop.f32.mrb[0].mxu0
    %421 = vmatprep.mubr.f32.mxu0 0.0
    %422 = vmatmul.mubr.f32.gmra.mrb[0].mxu0 %v346
    %v423 = vpop.f32.mrb[0].mxu0
    %v424 = vadd.f32 %v116, %v423
    %v425 = vpop.f32.mrb[0].mxu0
    %426 = vdwg.mxu0
    %427 = vrot.lane.b32.xlu0 %v213, 112
    %v428 = vpop.permute.xlu0 %427
    %429 = vrot.lane.b32.xlu0 %v218, 112
    %v430 = vpop.permute.xlu0 %429
    %431 = vrot.lane.b32.xlu0 %v213, 80
    %v432 = vpop.permute.xlu0 %431
    %433 = vrot.lane.b32.xlu0 %v218, 80
    %v434 = vpop.permute.xlu0 %433
    %v435 = vsel %vm252, %v428, 0
    %v437 = vsel %vm252, %v430, 0
    %v439 = vsel %vm252, %v432, 0
    %v441 = vsel %vm252, %v434, 0
    %443 = vmatprep.subr.mxu0 0.0
    %444 = vmatpush1.xpose.msra.mxu0 %v439
    %445 = vmatprep.subr.mxu0 0.0
    %446 = vmatpush1.xpose.msra.mxu0 %v441
    %447 = vmatprep.subr.mxu0 0.0
    %448 = vmatpush1.xpose.msra.mxu0 0.0
    %449 = vmatprep.subr.mxu0 0.0
    %450 = vmatpush1.xpose.msra.mxu0 0.0
    %451 = vmatprep.subr.mxu0 0.0
    %452 = vmatpush1.xpose.msra.mxu0 0.0
    %453 = vmatprep.subr.mxu0 0.0
    %454 = vmatpush1.xpose.msra.mxu0 0.0
    %455 = vmatprep.subr.mxu0 0.0
    %456 = vmatpush1.xpose.msra.mxu0 0.0
    %457 = vmatprep.subr.mxu0 0.0
    %458 = vmatpush1.xpose.msra.mxu0 0.0
    %459 = vmatprep.subr.mxu0 0.0
    %460 = vmatpush1.xpose.msra.mxu0 0.0
    %461 = vmatprep.subr.mxu0 0.0
    %462 = vmatpush1.xpose.msra.mxu0 0.0
    %463 = vmatprep.subr.mxu0 0.0
    %464 = vmatpush1.xpose.msra.mxu0 0.0
    %465 = vmatprep.subr.mxu0 0.0
    %466 = vmatpush1.xpose.msra.mxu0 0.0
    %467 = vmatprep.subr.mxu0 0.0
    %468 = vmatpush1.xpose.msra.mxu0 0.0
    %469 = vmatprep.subr.mxu0 0.0
    %470 = vmatpush1.xpose.msra.mxu0 0.0
    %471 = vmatprep.subr.mxu0 0.0
    %472 = vmatpush1.xpose.msra.mxu0 0.0
    %473 = vmatprep.subr.mxu0 0.0
    %474 = vmatpush1.xpose.msra.mxu0 0.0
    %475 = vmatprep.subr.mxu0 0.0
    %476 = vmatpush1.xpose.msra.mxu0 0.0
    %477 = vmatprep.subr.mxu0 0.0
    %478 = vmatpush1.xpose.msra.mxu0 0.0
    %479 = vmatprep.subr.mxu0 0.0
    %480 = vmatpush1.xpose.msra.mxu0 0.0
    %481 = vmatprep.subr.mxu0 0.0
    %482 = vmatpush1.xpose.msra.mxu0 0.0
    %483 = vmatprep.subr.mxu0 0.0
    %484 = vmatpush1.xpose.msra.mxu0 0.0
    %485 = vmatprep.subr.mxu0 0.0
    %486 = vmatpush1.xpose.msra.mxu0 0.0
    %487 = vmatprep.subr.mxu0 0.0
    %488 = vmatpush1.xpose.msra.mxu0 0.0
    %489 = vmatprep.subr.mxu0 0.0
    %490 = vmatpush1.xpose.msra.mxu0 0.0
    %491 = vmatprep.subr.mxu0 0.0
    %492 = vmatpush1.xpose.msra.mxu0 0.0
    %493 = vmatprep.subr.mxu0 0.0
    %494 = vmatpush1.xpose.msra.mxu0 0.0
    %495 = vmatprep.subr.mxu0 0.0
    %496 = vmatpush1.xpose.msra.mxu0 0.0
    %497 = vmatprep.subr.mxu0 0.0
    %498 = vmatpush1.xpose.msra.mxu0 0.0
    %499 = vmatprep.subr.mxu0 0.0
    %500 = vmatpush1.xpose.msra.mxu0 0.0
    %501 = vmatprep.subr.mxu0 0.0
    %502 = vmatpush1.xpose.msra.mxu0 0.0
    %503 = vmatprep.subr.mxu0 0.0
    %504 = vmatpush1.xpose.msra.mxu0 0.0
    %505 = vmatprep.subr.mxu0 0.0
    %506 = vmatpush1.xpose.msra.mxu0 0.0
    %507 = vmatprep.mubr.f32.mxu0 0.0
    %508 = vmatmul.mubr.f32.gmra.mrb[0].mxu0 %v435
    %v509 = vpop.f32.mrb[0].mxu0
    %v510 = vadd.f32 %v115, %v509
    %v511 = vpop.f32.mrb[0].mxu0
    %512 = vmatprep.mubr.f32.mxu0 0.0
    %513 = vmatmul.mubr.f32.gmra.mrb[0].mxu0 %v437
    %v514 = vpop.f32.mrb[0].mxu0
    %v515 = vadd.f32 %v116, %v514
    %v516 = vpop.f32.mrb[0].mxu0
    %517 = vdwg.mxu0
    %518 = vrot.lane.b32.xlu0 %v213, 104
    %v519 = vpop.permute.xlu0 %518
    %520 = vrot.lane.b32.xlu0 %v218, 104
    %v521 = vpop.permute.xlu0 %520
    %522 = vrot.lane.b32.xlu0 %v213, 72
    %v523 = vpop.permute.xlu0 %522
    %524 = vrot.lane.b32.xlu0 %v218, 72
    %v525 = vpop.permute.xlu0 %524
    %v526 = vsel %vm252, %v519, 0
    %v528 = vsel %vm252, %v521, 0
    %v530 = vsel %vm252, %v523, 0
    %v532 = vsel %vm252, %v525, 0
    %534 = vmatprep.subr.mxu0 0.0
    %535 = vmatpush1.xpose.msra.mxu0 %v530
    %536 = vmatprep.subr.mxu0 0.0
    %537 = vmatpush1.xpose.msra.mxu0 %v532
    %538 = vmatprep.subr.mxu0 0.0
    %539 = vmatpush1.xpose.msra.mxu0 0.0
    %540 = vmatprep.subr.mxu0 0.0
    %541 = vmatpush1.xpose.msra.mxu0 0.0
    %542 = vmatprep.subr.mxu0 0.0
    %543 = vmatpush1.xpose.msra.mxu0 0.0
    %544 = vmatprep.subr.mxu0 0.0
    %545 = vmatpush1.xpose.msra.mxu0 0.0
    %546 = vmatprep.subr.mxu0 0.0
    %547 = vmatpush1.xpose.msra.mxu0 0.0
    %548 = vmatprep.subr.mxu0 0.0
    %549 = vmatpush1.xpose.msra.mxu0 0.0
    %550 = vmatprep.subr.mxu0 0.0
    %551 = vmatpush1.xpose.msra.mxu0 0.0
    %552 = vmatprep.subr.mxu0 0.0
    %553 = vmatpush1.xpose.msra.mxu0 0.0
    %554 = vmatprep.subr.mxu0 0.0
    %555 = vmatpush1.xpose.msra.mxu0 0.0
    %556 = vmatprep.subr.mxu0 0.0
    %557 = vmatpush1.xpose.msra.mxu0 0.0
    %558 = vmatprep.subr.mxu0 0.0
    %559 = vmatpush1.xpose.msra.mxu0 0.0
    %560 = vmatprep.subr.mxu0 0.0
    %561 = vmatpush1.xpose.msra.mxu0 0.0
    %562 = vmatprep.subr.mxu0 0.0
    %563 = vmatpush1.xpose.msra.mxu0 0.0
    %564 = vmatprep.subr.mxu0 0.0
    %565 = vmatpush1.xpose.msra.mxu0 0.0
    %566 = vmatprep.subr.mxu0 0.0
    %567 = vmatpush1.xpose.msra.mxu0 0.0
    %568 = vmatprep.subr.mxu0 0.0
    %569 = vmatpush1.xpose.msra.mxu0 0.0
    %570 = vmatprep.subr.mxu0 0.0
    %571 = vmatpush1.xpose.msra.mxu0 0.0
    %572 = vmatprep.subr.mxu0 0.0
    %573 = vmatpush1.xpose.msra.mxu0 0.0
    %574 = vmatprep.subr.mxu0 0.0
    %575 = vmatpush1.xpose.msra.mxu0 0.0
    %576 = vmatprep.subr.mxu0 0.0
    %577 = vmatpush1.xpose.msra.mxu0 0.0
    %578 = vmatprep.subr.mxu0 0.0
    %579 = vmatpush1.xpose.msra.mxu0 0.0
    %580 = vmatprep.subr.mxu0 0.0
    %581 = vmatpush1.xpose.msra.mxu0 0.0
    %582 = vmatprep.subr.mxu0 0.0
    %583 = vmatpush1.xpose.msra.mxu0 0.0
    %584 = vmatprep.subr.mxu0 0.0
    %585 = vmatpush1.xpose.msra.mxu0 0.0
    %586 = vmatprep.subr.mxu0 0.0
    %587 = vmatpush1.xpose.msra.mxu0 0.0
    %588 = vmatprep.subr.mxu0 0.0
    %589 = vmatpush1.xpose.msra.mxu0 0.0
    %590 = vmatprep.subr.mxu0 0.0
    %591 = vmatpush1.xpose.msra.mxu0 0.0
    %592 = vmatprep.subr.mxu0 0.0
    %593 = vmatpush1.xpose.msra.mxu0 0.0
    %594 = vmatprep.subr.mxu0 0.0
    %595 = vmatpush1.xpose.msra.mxu0 0.0
    %596 = vmatprep.subr.mxu0 0.0
    %597 = vmatpush1.xpose.msra.mxu0 0.0
    %598 = vmatprep.mubr.f32.mxu0 0.0
    %599 = vmatmul.mubr.f32.gmra.mrb[0].mxu0 %v526
    %v600 = vpop.f32.mrb[0].mxu0
    %v601 = vadd.f32 %v115, %v600
    %v602 = vpop.f32.mrb[0].mxu0
    %603 = vmatprep.mubr.f32.mxu0 0.0
    %604 = vmatmul.mubr.f32.gmra.mrb[0].mxu0 %v528
    %v605 = vpop.f32.mrb[0].mxu0
    %v606 = vadd.f32 %v116, %v605
    %v607 = vpop.f32.mrb[0].mxu0
    %608 = vdwg.mxu0
    %vm609 = vcmask 130048
    %v610 = vsel %vm609, %v328, -inf
    %611 = vmax.xlane.f32.xlu0 %v610
    %v612 = vpop.xlane.xlu0 %611
    %v613 = vsel %vm609, %v333, -inf
    %614 = vmax.xlane.f32.xlu0 %v613
    %v615 = vpop.xlane.xlu0 %614
    %v616 = vsel %vm609, %v419, -inf
    %617 = vmax.xlane.f32.xlu0 %v616
    %v618 = vpop.xlane.xlu0 %617
    %v619 = vsel %vm609, %v424, -inf
    %620 = vmax.xlane.f32.xlu0 %v619
    %v621 = vpop.xlane.xlu0 %620
    %v622 = vsel %vm609, %v510, -inf
    %623 = vmax.xlane.f32.xlu0 %v622
    %v624 = vpop.xlane.xlu0 %623
    %v625 = vsel %vm609, %v515, -inf
    %626 = vmax.xlane.f32.xlu0 %v625
    %v627 = vpop.xlane.xlu0 %626
    %v628 = vsel %vm609, %v601, -inf
    %629 = vmax.xlane.f32.xlu0 %v628
    %v630 = vpop.xlane.xlu0 %629
    %v631 = vsel %vm609, %v606, -inf
    %632 = vmax.xlane.f32.xlu0 %v631
    %v633 = vpop.xlane.xlu0 %632
    %v634 = vsub.f32 %v328, %v612
    %v635 = vsub.f32 %v333, %v615
    %v636 = vsub.f32 %v419, %v618
    %v637 = vsub.f32 %v424, %v621
    %v638 = vsub.f32 %v510, %v624
    %v639 = vsub.f32 %v515, %v627
    %v640 = vsub.f32 %v601, %v630
    %v641 = vsub.f32 %v606, %v633
    %v642 = vmul.f32 %v634, 1.442695
    %v643 = vpow.pop %v642
    %v644 = vmul.f32 %v635, 1.442695
    %v645 = vpow.pop %v644
    %v646 = vmul.f32 %v636, 1.442695
    %v647 = vpow.pop %v646
    %v648 = vmul.f32 %v637, 1.442695
    %v649 = vpow.pop %v648
    %v650 = vmul.f32 %v638, 1.442695
    %v651 = vpow.pop %v650
    %v652 = vmul.f32 %v639, 1.442695
    %v653 = vpow.pop %v652
    %v654 = vmul.f32 %v640, 1.442695
    %v655 = vpow.pop %v654
    %v656 = vmul.f32 %v641, 1.442695
    %v657 = vpow.pop %v656
    %v658 = vsel %vm609, %v643, 0.0
    %659 = vadd.xlane.f32.xlu0 %v658
    %v660 = vpop.xlane.xlu0 %659
    %v661 = vsel %vm609, %v645, 0.0
    %662 = vadd.xlane.f32.xlu0 %v661
    %v663 = vpop.xlane.xlu0 %662
    %v664 = vsel %vm609, %v647, 0.0
    %665 = vadd.xlane.f32.xlu0 %v664
    %v666 = vpop.xlane.xlu0 %665
    %v667 = vsel %vm609, %v649, 0.0
    %668 = vadd.xlane.f32.xlu0 %v667
    %v669 = vpop.xlane.xlu0 %668
    %v670 = vsel %vm609, %v651, 0.0
    %671 = vadd.xlane.f32.xlu0 %v670
    %v672 = vpop.xlane.xlu0 %671
    %v673 = vsel %vm609, %v653, 0.0
    %674 = vadd.xlane.f32.xlu0 %v673
    %v675 = vpop.xlane.xlu0 %674
    %v676 = vsel %vm609, %v655, 0.0
    %677 = vadd.xlane.f32.xlu0 %v676
    %v678 = vpop.xlane.xlu0 %677
    %v679 = vsel %vm609, %v657, 0.0
    %680 = vadd.xlane.f32.xlu0 %v679
    %v681 = vpop.xlane.xlu0 %680
    %v682 = vrcp.pop %v660
    %v683 = vrcp.pop %v663
    %v684 = vrcp.pop %v666
    %v685 = vrcp.pop %v669
    %v686 = vrcp.pop %v672
    %v687 = vrcp.pop %v675
    %v688 = vrcp.pop %v678
    %v689 = vrcp.pop %v681
    %v690 = vmul.f32 %v643, %v682
    %v691 = vmul.f32 %v645, %v683
    %v692 = vmul.f32 %v647, %v684
    %v693 = vmul.f32 %v649, %v685
    %v694 = vmul.f32 %v651, %v686
    %v695 = vmul.f32 %v653, %v687
    %v696 = vmul.f32 %v655, %v688
    %v697 = vmul.f32 %v657, %v689
    %698 = vrot.lane.b32.xlu0 %v213, 64
    %v699 = vpop.permute.xlu0 %698
    %700 = vrot.lane.b32.xlu0 %v218, 64
    %v701 = vpop.permute.xlu0 %700
    %v705 = vsel %vm609, %v690, 0
    %v708 = vsel %vm609, %v691, 0
    %710 = vmatprep.subr.mxu0 0.0
    %711 = vmatpush1.msra.mxu0 %v699
    %712 = vmatprep.subr.mxu0 0.0
    %713 = vmatpush1.msra.mxu0 %v701
    %714 = vmatprep.subr.mxu0 0.0
    %715 = vmatpush1.msra.mxu0 0.0
    %716 = vmatprep.subr.mxu0 0.0
    %717 = vmatpush1.msra.mxu0 0.0
    %718 = vmatprep.subr.mxu0 0.0
    %719 = vmatpush1.msra.mxu0 0.0
    %720 = vmatprep.subr.mxu0 0.0
    %721 = vmatpush1.msra.mxu0 0.0
    %722 = vmatprep.subr.mxu0 0.0
    %723 = vmatpush1.msra.mxu0 0.0
    %724 = vmatprep.subr.mxu0 0.0
    %725 = vmatpush1.msra.mxu0 0.0
    %726 = vmatprep.subr.mxu0 0.0
    %727 = vmatpush1.msra.mxu0 0.0
    %728 = vmatprep.subr.mxu0 0.0
    %729 = vmatpush1.msra.mxu0 0.0
    %730 = vmatprep.subr.mxu0 0.0
    %731 = vmatpush1.msra.mxu0 0.0
    %732 = vmatprep.subr.mxu0 0.0
    %733 = vmatpush1.msra.mxu0 0.0
    %734 = vmatprep.subr.mxu0 0.0
    %735 = vmatpush1.msra.mxu0 0.0
    %736 = vmatprep.subr.mxu0 0.0
    %737 = vmatpush1.msra.mxu0 0.0
    %738 = vmatprep.subr.mxu0 0.0
    %739 = vmatpush1.msra.mxu0 0.0
    %740 = vmatprep.subr.mxu0 0.0
    %741 = vmatpush1.msra.mxu0 0.0
    %742 = vmatprep.subr.mxu0 0.0
    %743 = vmatpush1.msra.mxu0 0.0
    %744 = vmatprep.subr.mxu0 0.0
    %745 = vmatpush1.msra.mxu0 0.0
    %746 = vmatprep.subr.mxu0 0.0
    %747 = vmatpush1.msra.mxu0 0.0
    %748 = vmatprep.subr.mxu0 0.0
    %749 = vmatpush1.msra.mxu0 0.0
    %750 = vmatprep.subr.mxu0 0.0
    %751 = vmatpush1.msra.mxu0 0.0
    %752 = vmatprep.subr.mxu0 0.0
    %753 = vmatpush1.msra.mxu0 0.0
    %754 = vmatprep.subr.mxu0 0.0
    %755 = vmatpush1.msra.mxu0 0.0
    %756 = vmatprep.subr.mxu0 0.0
    %757 = vmatpush1.msra.mxu0 0.0
    %758 = vmatprep.subr.mxu0 0.0
    %759 = vmatpush1.msra.mxu0 0.0
    %760 = vmatprep.subr.mxu0 0.0
    %761 = vmatpush1.msra.mxu0 0.0
    %762 = vmatprep.subr.mxu0 0.0
    %763 = vmatpush1.msra.mxu0 0.0
    %764 = vmatprep.subr.mxu0 0.0
    %765 = vmatpush1.msra.mxu0 0.0
    %766 = vmatprep.subr.mxu0 0.0
    %767 = vmatpush1.msra.mxu0 0.0
    %768 = vmatprep.subr.mxu0 0.0
    %769 = vmatpush1.msra.mxu0 0.0
    %770 = vmatprep.subr.mxu0 0.0
    %771 = vmatpush1.msra.mxu0 0.0
    %772 = vmatprep.subr.mxu0 0.0
    %773 = vmatpush1.msra.mxu0 0.0
    %774 = vmatprep.mubr.f32.mxu0 0.0
    %775 = vmatmul.mubr.f32.gmra.mrb[0].mxu0 %v705
    %v776 = vpop.f32.mrb[0].mxu0
    %v777 = vadd.f32 0.0, %v776
    %v778 = vpop.f32.mrb[0].mxu0
    %779 = vmatprep.mubr.f32.mxu0 0.0
    %780 = vmatmul.mubr.f32.gmra.mrb[0].mxu0 %v708
    %v781 = vpop.f32.mrb[0].mxu0
    %v782 = vadd.f32 0.0, %v781
    %v783 = vpop.f32.mrb[0].mxu0
    %784 = vdwg.mxu0
    %785 = vrot.lane.b32.xlu0 %v213, 56
    %v786 = vpop.permute.xlu0 %785
    %787 = vrot.lane.b32.xlu0 %v218, 56
    %v788 = vpop.permute.xlu0 %787
    %v792 = vsel %vm609, %v692, 0
    %v795 = vsel %vm609, %v693, 0
    %797 = vmatprep.subr.mxu0 0.0
    %798 = vmatpush1.msra.mxu0 %v786
    %799 = vmatprep.subr.mxu0 0.0
    %800 = vmatpush1.msra.mxu0 %v788
    %801 = vmatprep.subr.mxu0 0.0
    %802 = vmatpush1.msra.mxu0 0.0
    %803 = vmatprep.subr.mxu0 0.0
    %804 = vmatpush1.msra.mxu0 0.0
    %805 = vmatprep.subr.mxu0 0.0
    %806 = vmatpush1.msra.mxu0 0.0
    %807 = vmatprep.subr.mxu0 0.0
    %808 = vmatpush1.msra.mxu0 0.0
    %809 = vmatprep.subr.mxu0 0.0
    %810 = vmatpush1.msra.mxu0 0.0
    %811 = vmatprep.subr.mxu0 0.0
    %812 = vmatpush1.msra.mxu0 0.0
    %813 = vmatprep.subr.mxu0 0.0
    %814 = vmatpush1.msra.mxu0 0.0
    %815 = vmatprep.subr.mxu0 0.0
    %816 = vmatpush1.msra.mxu0 0.0
    %817 = vmatprep.subr.mxu0 0.0
    %818 = vmatpush1.msra.mxu0 0.0
    %819 = vmatprep.subr.mxu0 0.0
    %820 = vmatpush1.msra.mxu0 0.0
    %821 = vmatprep.subr.mxu0 0.0
    %822 = vmatpush1.msra.mxu0 0.0
    %823 = vmatprep.subr.mxu0 0.0
    %824 = vmatpush1.msra.mxu0 0.0
    %825 = vmatprep.subr.mxu0 0.0
    %826 = vmatpush1.msra.mxu0 0.0
    %827 = vmatprep.subr.mxu0 0.0
    %828 = vmatpush1.msra.mxu0 0.0
    %829 = vmatprep.subr.mxu0 0.0
    %830 = vmatpush1.msra.mxu0 0.0
    %831 = vmatprep.subr.mxu0 0.0
    %832 = vmatpush1.msra.mxu0 0.0
    %833 = vmatprep.subr.mxu0 0.0
    %834 = vmatpush1.msra.mxu0 0.0
    %835 = vmatprep.subr.mxu0 0.0
    %836 = vmatpush1.msra.mxu0 0.0
    %837 = vmatprep.subr.mxu0 0.0
    %838 = vmatpush1.msra.mxu0 0.0
    %839 = vmatprep.subr.mxu0 0.0
    %840 = vmatpush1.msra.mxu0 0.0
    %841 = vmatprep.subr.mxu0 0.0
    %842 = vmatpush1.msra.mxu0 0.0
    %843 = vmatprep.subr.mxu0 0.0
    %844 = vmatpush1.msra.mxu0 0.0
    %845 = vmatprep.subr.mxu0 0.0
    %846 = vmatpush1.msra.mxu0 0.0
    %847 = vmatprep.subr.mxu0 0.0
    %848 = vmatpush1.msra.mxu0 0.0
    %849 = vmatprep.subr.mxu0 0.0
    %850 = vmatpush1.msra.mxu0 0.0
    %851 = vmatprep.subr.mxu0 0.0
    %852 = vmatpush1.msra.mxu0 0.0
    %853 = vmatprep.subr.mxu0 0.0
    %854 = vmatpush1.msra.mxu0 0.0
    %855 = vmatprep.subr.mxu0 0.0
    %856 = vmatpush1.msra.mxu0 0.0
    %857 = vmatprep.subr.mxu0 0.0
    %858 = vmatpush1.msra.mxu0 0.0
    %859 = vmatprep.subr.mxu0 0.0
    %860 = vmatpush1.msra.mxu0 0.0
    %861 = vmatprep.mubr.f32.mxu0 0.0
    %862 = vmatmul.mubr.f32.gmra.mrb[0].mxu0 %v792
    %v863 = vpop.f32.mrb[0].mxu0
    %v864 = vadd.f32 0.0, %v863
    %v865 = vpop.f32.mrb[0].mxu0
    %866 = vmatprep.mubr.f32.mxu0 0.0
    %867 = vmatmul.mubr.f32.gmra.mrb[0].mxu0 %v795
    %v868 = vpop.f32.mrb[0].mxu0
    %v869 = vadd.f32 0.0, %v868
    %v870 = vpop.f32.mrb[0].mxu0
    %871 = vdwg.mxu0
    %872 = vrot.lane.b32.xlu0 %v213, 48
    %v873 = vpop.permute.xlu0 %872
    %874 = vrot.lane.b32.xlu0 %v218, 48
    %v875 = vpop.permute.xlu0 %874
    %v879 = vsel %vm609, %v694, 0
    %v882 = vsel %vm609, %v695, 0
    %884 = vmatprep.subr.mxu0 0.0
    %885 = vmatpush1.msra.mxu0 %v873
    %886 = vmatprep.subr.mxu0 0.0
    %887 = vmatpush1.msra.mxu0 %v875
    %888 = vmatprep.subr.mxu0 0.0
    %889 = vmatpush1.msra.mxu0 0.0
    %890 = vmatprep.subr.mxu0 0.0
    %891 = vmatpush1.msra.mxu0 0.0
    %892 = vmatprep.subr.mxu0 0.0
    %893 = vmatpush1.msra.mxu0 0.0
    %894 = vmatprep.subr.mxu0 0.0
    %895 = vmatpush1.msra.mxu0 0.0
    %896 = vmatprep.subr.mxu0 0.0
    %897 = vmatpush1.msra.mxu0 0.0
    %898 = vmatprep.subr.mxu0 0.0
    %899 = vmatpush1.msra.mxu0 0.0
    %900 = vmatprep.subr.mxu0 0.0
    %901 = vmatpush1.msra.mxu0 0.0
    %902 = vmatprep.subr.mxu0 0.0
    %903 = vmatpush1.msra.mxu0 0.0
    %904 = vmatprep.subr.mxu0 0.0
    %905 = vmatpush1.msra.mxu0 0.0
    %906 = vmatprep.subr.mxu0 0.0
    %907 = vmatpush1.msra.mxu0 0.0
    %908 = vmatprep.subr.mxu0 0.0
    %909 = vmatpush1.msra.mxu0 0.0
    %910 = vmatprep.subr.mxu0 0.0
    %911 = vmatpush1.msra.mxu0 0.0
    %912 = vmatprep.subr.mxu0 0.0
    %913 = vmatpush1.msra.mxu0 0.0
    %914 = vmatprep.subr.mxu0 0.0
    %915 = vmatpush1.msra.mxu0 0.0
    %916 = vmatprep.subr.mxu0 0.0
    %917 = vmatpush1.msra.mxu0 0.0
    %918 = vmatprep.subr.mxu0 0.0
    %919 = vmatpush1.msra.mxu0 0.0
    %920 = vmatprep.subr.mxu0 0.0
    %921 = vmatpush1.msra.mxu0 0.0
    %922 = vmatprep.subr.mxu0 0.0
    %923 = vmatpush1.msra.mxu0 0.0
    %924 = vmatprep.subr.mxu0 0.0
    %925 = vmatpush1.msra.mxu0 0.0
    %926 = vmatprep.subr.mxu0 0.0
    %927 = vmatpush1.msra.mxu0 0.0
    %928 = vmatprep.subr.mxu0 0.0
    %929 = vmatpush1.msra.mxu0 0.0
    %930 = vmatprep.subr.mxu0 0.0
    %931 = vmatpush1.msra.mxu0 0.0
    %932 = vmatprep.subr.mxu0 0.0
    %933 = vmatpush1.msra.mxu0 0.0
    %934 = vmatprep.subr.mxu0 0.0
    %935 = vmatpush1.msra.mxu0 0.0
    %936 = vmatprep.subr.mxu0 0.0
    %937 = vmatpush1.msra.mxu0 0.0
    %938 = vmatprep.subr.mxu0 0.0
    %939 = vmatpush1.msra.mxu0 0.0
    %940 = vmatprep.subr.mxu0 0.0
    %941 = vmatpush1.msra.mxu0 0.0
    %942 = vmatprep.subr.mxu0 0.0
    %943 = vmatpush1.msra.mxu0 0.0
    %944 = vmatprep.subr.mxu0 0.0
    %945 = vmatpush1.msra.mxu0 0.0
    %946 = vmatprep.subr.mxu0 0.0
    %947 = vmatpush1.msra.mxu0 0.0
    %948 = vmatprep.mubr.f32.mxu0 0.0
    %949 = vmatmul.mubr.f32.gmra.mrb[0].mxu0 %v879
    %v950 = vpop.f32.mrb[0].mxu0
    %v951 = vadd.f32 0.0, %v950
    %v952 = vpop.f32.mrb[0].mxu0
    %953 = vmatprep.mubr.f32.mxu0 0.0
    %954 = vmatmul.mubr.f32.gmra.mrb[0].mxu0 %v882
    %v955 = vpop.f32.mrb[0].mxu0
    %v956 = vadd.f32 0.0, %v955
    %v957 = vpop.f32.mrb[0].mxu0
    %958 = vdwg.mxu0
    %959 = vrot.lane.b32.xlu0 %v213, 40
    %v960 = vpop.permute.xlu0 %959
    %961 = vrot.lane.b32.xlu0 %v218, 40
    %v962 = vpop.permute.xlu0 %961
    %v966 = vsel %vm609, %v696, 0
    %v969 = vsel %vm609, %v697, 0
    %971 = vmatprep.subr.mxu0 0.0
    %972 = vmatpush1.msra.mxu0 %v960
    %973 = vmatprep.subr.mxu0 0.0
    %974 = vmatpush1.msra.mxu0 %v962
    %975 = vmatprep.subr.mxu0 0.0
    %976 = vmatpush1.msra.mxu0 0.0
    %977 = vmatprep.subr.mxu0 0.0
    %978 = vmatpush1.msra.mxu0 0.0
    %979 = vmatprep.subr.mxu0 0.0
    %980 = vmatpush1.msra.mxu0 0.0
    %981 = vmatprep.subr.mxu0 0.0
    %982 = vmatpush1.msra.mxu0 0.0
    %983 = vmatprep.subr.mxu0 0.0
    %984 = vmatpush1.msra.mxu0 0.0
    %985 = vmatprep.subr.mxu0 0.0
    %986 = vmatpush1.msra.mxu0 0.0
    %987 = vmatprep.subr.mxu0 0.0
    %988 = vmatpush1.msra.mxu0 0.0
    %989 = vmatprep.subr.mxu0 0.0
    %990 = vmatpush1.msra.mxu0 0.0
    %991 = vmatprep.subr.mxu0 0.0
    %992 = vmatpush1.msra.mxu0 0.0
    %993 = vmatprep.subr.mxu0 0.0
    %994 = vmatpush1.msra.mxu0 0.0
    %995 = vmatprep.subr.mxu0 0.0
    %996 = vmatpush1.msra.mxu0 0.0
    %997 = vmatprep.subr.mxu0 0.0
    %998 = vmatpush1.msra.mxu0 0.0
    %999 = vmatprep.subr.mxu0 0.0
    %1000 = vmatpush1.msra.mxu0 0.0
    %1001 = vmatprep.subr.mxu0 0.0
    %1002 = vmatpush1.msra.mxu0 0.0
    %1003 = vmatprep.subr.mxu0 0.0
    %1004 = vmatpush1.msra.mxu0 0.0
    %1005 = vmatprep.subr.mxu0 0.0
    %1006 = vmatpush1.msra.mxu0 0.0
    %1007 = vmatprep.subr.mxu0 0.0
    %1008 = vmatpush1.msra.mxu0 0.0
    %1009 = vmatprep.subr.mxu0 0.0
    %1010 = vmatpush1.msra.mxu0 0.0
    %1011 = vmatprep.subr.mxu0 0.0
    %1012 = vmatpush1.msra.mxu0 0.0
    %1013 = vmatprep.subr.mxu0 0.0
    %1014 = vmatpush1.msra.mxu0 0.0
    %1015 = vmatprep.subr.mxu0 0.0
    %1016 = vmatpush1.msra.mxu0 0.0
    %1017 = vmatprep.subr.mxu0 0.0
    %1018 = vmatpush1.msra.mxu0 0.0
    %1019 = vmatprep.subr.mxu0 0.0
    %1020 = vmatpush1.msra.mxu0 0.0
    %1021 = vmatprep.subr.mxu0 0.0
    %1022 = vmatpush1.msra.mxu0 0.0
    %1023 = vmatprep.subr.mxu0 0.0
    %1024 = vmatpush1.msra.mxu0 0.0
    %1025 = vmatprep.subr.mxu0 0.0
    %1026 = vmatpush1.msra.mxu0 0.0
    %1027 = vmatprep.subr.mxu0 0.0
    %1028 = vmatpush1.msra.mxu0 0.0
    %1029 = vmatprep.subr.mxu0 0.0
    %1030 = vmatpush1.msra.mxu0 0.0
    %1031 = vmatprep.subr.mxu0 0.0
    %1032 = vmatpush1.msra.mxu0 0.0
    %1033 = vmatprep.subr.mxu0 0.0
    %1034 = vmatpush1.msra.mxu0 0.0
    %1035 = vmatprep.mubr.f32.mxu0 0.0
    %1036 = vmatmul.mubr.f32.gmra.mrb[0].mxu0 %v966
    %v1037 = vpop.f32.mrb[0].mxu0
    %v1038 = vadd.f32 0.0, %v1037
    %v1039 = vpop.f32.mrb[0].mxu0
    %1040 = vmatprep.mubr.f32.mxu0 0.0
    %1041 = vmatmul.mubr.f32.gmra.mrb[0].mxu0 %v969
    %v1042 = vpop.f32.mrb[0].mxu0
    %v1043 = vadd.f32 0.0, %v1042
    %v1044 = vpop.f32.mrb[0].mxu0
    %1045 = vdwg.mxu0
    %1048 = vrot.lane.b32.xlu0 %v864, 8
    %v1049 = vpop.permute.xlu0 %1048
    %1050 = vrot.lane.b32.xlu0 %v869, 8
    %v1051 = vpop.permute.xlu0 %1050
    %1056 = vrot.lane.b32.xlu0 %v951, 16
    %v1057 = vpop.permute.xlu0 %1056
    %1058 = vrot.lane.b32.xlu0 %v956, 16
    %v1059 = vpop.permute.xlu0 %1058
    %1064 = vrot.lane.b32.xlu0 %v1038, 24
    %v1065 = vpop.permute.xlu0 %1064
    %1066 = vrot.lane.b32.xlu0 %v1043, 24
    %v1067 = vpop.permute.xlu0 %1066
    %v1070 = vsel %vm252, %v777, %v1049
    %v1071 = vsel %vm252, %v782, %v1051
    %v1072 = vsel %vm609, %v1070, %v1057
    %v1073 = vsel %vm609, %v1071, %v1059
    %vm1074 = vcmask 195584
    %v1075 = vsel %vm1074, %v1072, %v1065
    %v1076 = vsel %vm1074, %v1073, %v1067
    %v1077 = vlaneseq
    %v1078 = vshrl.u32 %v1077, 7
    %v1079 = vsub.s32 0, %v1078
    %v1080 = vrot.slane %v245, %v1079
    %v1082 = vsel %vm127, %v1075, 0
    %v1085 = vsel %vm127, %v1076, 0
    %1087 = vmatprep.subr.mxu0 0.0
    %1088 = vmatpush1.msra.mxu0 %v241
    %1089 = vmatprep.subr.mxu0 0.0
    %1090 = vmatpush1.msra.mxu0 %v242
    %1091 = vmatprep.subr.mxu0 0.0
    %1092 = vmatpush1.msra.mxu0 %v243
    %1093 = vmatprep.subr.mxu0 0.0
    %1094 = vmatpush1.msra.mxu0 %v244
    %1095 = vmatprep.subr.mxu0 0.0
    %1096 = vmatpush1.msra.mxu0 0.0
    %1097 = vmatprep.subr.mxu0 0.0
    %1098 = vmatpush1.msra.mxu0 0.0
    %1099 = vmatprep.subr.mxu0 0.0
    %1100 = vmatpush1.msra.mxu0 0.0
    %1101 = vmatprep.subr.mxu0 0.0
    %1102 = vmatpush1.msra.mxu0 0.0
    %1103 = vmatprep.subr.mxu0 0.0
    %1104 = vmatpush1.msra.mxu0 0.0
    %1105 = vmatprep.subr.mxu0 0.0
    %1106 = vmatpush1.msra.mxu0 0.0
    %1107 = vmatprep.subr.mxu0 0.0
    %1108 = vmatpush1.msra.mxu0 0.0
    %1109 = vmatprep.subr.mxu0 0.0
    %1110 = vmatpush1.msra.mxu0 0.0
    %1111 = vmatprep.subr.mxu0 0.0
    %1112 = vmatpush1.msra.mxu0 0.0
    %1113 = vmatprep.subr.mxu0 0.0
    %1114 = vmatpush1.msra.mxu0 0.0
    %1115 = vmatprep.subr.mxu0 0.0
    %1116 = vmatpush1.msra.mxu0 0.0
    %1117 = vmatprep.subr.mxu0 0.0
    %1118 = vmatpush1.msra.mxu0 0.0
    %1119 = vmatprep.subr.mxu0 0.0
    %1120 = vmatpush1.msra.mxu0 0.0
    %1121 = vmatprep.subr.mxu0 0.0
    %1122 = vmatpush1.msra.mxu0 0.0
    %1123 = vmatprep.subr.mxu0 0.0
    %1124 = vmatpush1.msra.mxu0 0.0
    %1125 = vmatprep.subr.mxu0 0.0
    %1126 = vmatpush1.msra.mxu0 0.0
    %1127 = vmatprep.subr.mxu0 0.0
    %1128 = vmatpush1.msra.mxu0 0.0
    %1129 = vmatprep.subr.mxu0 0.0
    %1130 = vmatpush1.msra.mxu0 0.0
    %1131 = vmatprep.subr.mxu0 0.0
    %1132 = vmatpush1.msra.mxu0 0.0
    %1133 = vmatprep.subr.mxu0 0.0
    %1134 = vmatpush1.msra.mxu0 0.0
    %1135 = vmatprep.subr.mxu0 0.0
    %1136 = vmatpush1.msra.mxu0 0.0
    %1137 = vmatprep.subr.mxu0 0.0
    %1138 = vmatpush1.msra.mxu0 0.0
    %1139 = vmatprep.subr.mxu0 0.0
    %1140 = vmatpush1.msra.mxu0 0.0
    %1141 = vmatprep.subr.mxu0 0.0
    %1142 = vmatpush1.msra.mxu0 0.0
    %1143 = vmatprep.subr.mxu0 0.0
    %1144 = vmatpush1.msra.mxu0 0.0
    %1145 = vmatprep.subr.mxu0 0.0
    %1146 = vmatpush1.msra.mxu0 0.0
    %1147 = vmatprep.subr.mxu0 0.0
    %1148 = vmatpush1.msra.mxu0 0.0
    %1149 = vmatprep.subr.mxu0 0.0
    %1150 = vmatpush1.msra.mxu0 0.0
    %1151 = vmatprep.mubr.f32.mxu0 0.0
    %1152 = vmatmul.mubr.f32.gmra.mrb[0].mxu0 %v1082
    %v1153 = vpop.f32.mrb[0].mxu0
    %v1154 = vadd.f32 %v1080, %v1153
    %v1155 = vpop.f32.mrb[0].mxu0
    %1156 = vmatprep.mubr.f32.mxu0 0.0
    %1157 = vmatmul.mubr.f32.gmra.mrb[0].mxu0 %v1085
    %v1158 = vpop.f32.mrb[0].mxu0
    %v1159 = vadd.f32 %v1080, %v1158
    %v1160 = vpop.f32.mrb[0].mxu0
    %1161 = vdwg.mxu0
    %v1162 = vld [vmem:[%s6 + $0x1] sm:$0x1]
    %v1163 = vld [vmem:[%s6 + $0x2] sm:$0x1]
    %v1164 = vadd.f32 %v1154, %v109
    %v1165 = vadd.f32 %v1159, %v110
    %v1166 = vsel %vm127, %v1164, 0.0
    %1167 = vadd.xlane.f32.xlu0 %v1166
    %v1168 = vpop.xlane.xlu0 %1167
    %v1169 = vsel %vm127, %v1165, 0.0
    %1170 = vadd.xlane.f32.xlu0 %v1169
    %v1171 = vpop.xlane.xlu0 %1170
    %v1172 = vrcp.pop 32.0
    %v1173 = vmul.f32 %v1168, %v1172
    %v1174 = vmul.f32 %v1171, %v1172
    %v1175 = vsub.f32 %v1164, %v1173
    %v1176 = vsub.f32 %v1165, %v1174
    %v1177 = vmul.f32 %v1175, %v1175
    %v1178 = vmul.f32 %v1176, %v1176
    %v1179 = vsel %vm127, %v1177, 0.0
    %1180 = vadd.xlane.f32.xlu0 %v1179
    %v1181 = vpop.xlane.xlu0 %1180
    %v1182 = vsel %vm127, %v1178, 0.0
    %1183 = vadd.xlane.f32.xlu0 %v1182
    %v1184 = vpop.xlane.xlu0 %1183
    %v1185 = vmul.f32 %v1181, %v1172
    %v1186 = vmul.f32 %v1184, %v1172
    %v1187 = vadd.f32 %v1185, 1e-05
    %v1188 = vadd.f32 %v1186, 1e-05
    %v1189 = vrsqrt.pop %v1187
    %v1190 = vrsqrt.pop %v1188
    %v1191 = vmul.f32 %v1175, %v1189
    %v1192 = vmul.f32 %v1176, %v1190
    %v1193 = vlaneseq
    %v1194 = vshrl.u32 %v1193, 7
    %v1195 = vsub.s32 0, %v1194
    %v1196 = vrot.slane %v1162, %v1195
    %v1197 = vmul.f32 %v1191, %v1196
    %v1198 = vmul.f32 %v1192, %v1196
    %v1199 = vlaneseq
    %v1200 = vshrl.u32 %v1199, 7
    %v1201 = vsub.s32 0, %v1200
    %v1202 = vrot.slane %v1163, %v1201
    %v1203 = vadd.f32 %v1197, %v1202
    %v1204 = vadd.f32 %v1198, %v1202
    %v1206 = vsel %vm127, %v1203, 0
    %v1209 = vsel %vm127, %v1204, 0
    %1211 = vmatprep.subr.mxu0 0.0
    %1212 = vmatpush1.msra.mxu0 %v120
    %1213 = vmatprep.subr.mxu0 0.0
    %1214 = vmatpush1.msra.mxu0 %v122
    %1215 = vmatprep.subr.mxu0 0.0
    %1216 = vmatpush1.msra.mxu0 %v124
    %1217 = vmatprep.subr.mxu0 0.0
    %1218 = vmatpush1.msra.mxu0 %v126
    %1219 = vmatprep.subr.mxu0 0.0
    %1220 = vmatpush1.msra.mxu0 0.0
    %1221 = vmatprep.subr.mxu0 0.0
    %1222 = vmatpush1.msra.mxu0 0.0
    %1223 = vmatprep.subr.mxu0 0.0
    %1224 = vmatpush1.msra.mxu0 0.0
    %1225 = vmatprep.subr.mxu0 0.0
    %1226 = vmatpush1.msra.mxu0 0.0
    %1227 = vmatprep.subr.mxu0 0.0
    %1228 = vmatpush1.msra.mxu0 0.0
    %1229 = vmatprep.subr.mxu0 0.0
    %1230 = vmatpush1.msra.mxu0 0.0
    %1231 = vmatprep.subr.mxu0 0.0
    %1232 = vmatpush1.msra.mxu0 0.0
    %1233 = vmatprep.subr.mxu0 0.0
    %1234 = vmatpush1.msra.mxu0 0.0
    %1235 = vmatprep.subr.mxu0 0.0
    %1236 = vmatpush1.msra.mxu0 0.0
    %1237 = vmatprep.subr.mxu0 0.0
    %1238 = vmatpush1.msra.mxu0 0.0
    %1239 = vmatprep.subr.mxu0 0.0
    %1240 = vmatpush1.msra.mxu0 0.0
    %1241 = vmatprep.subr.mxu0 0.0
    %1242 = vmatpush1.msra.mxu0 0.0
    %1243 = vmatprep.subr.mxu0 0.0
    %1244 = vmatpush1.msra.mxu0 0.0
    %1245 = vmatprep.subr.mxu0 0.0
    %1246 = vmatpush1.msra.mxu0 0.0
    %1247 = vmatprep.subr.mxu0 0.0
    %1248 = vmatpush1.msra.mxu0 0.0
    %1249 = vmatprep.subr.mxu0 0.0
    %1250 = vmatpush1.msra.mxu0 0.0
    %1251 = vmatprep.subr.mxu0 0.0
    %1252 = vmatpush1.msra.mxu0 0.0
    %1253 = vmatprep.subr.mxu0 0.0
    %1254 = vmatpush1.msra.mxu0 0.0
    %1255 = vmatprep.subr.mxu0 0.0
    %1256 = vmatpush1.msra.mxu0 0.0
    %1257 = vmatprep.subr.mxu0 0.0
    %1258 = vmatpush1.msra.mxu0 0.0
    %1259 = vmatprep.subr.mxu0 0.0
    %1260 = vmatpush1.msra.mxu0 0.0
    %1261 = vmatprep.subr.mxu0 0.0
    %1262 = vmatpush1.msra.mxu0 0.0
    %1263 = vmatprep.subr.mxu0 0.0
    %1264 = vmatpush1.msra.mxu0 0.0
    %1265 = vmatprep.subr.mxu0 0.0
    %1266 = vmatpush1.msra.mxu0 0.0
    %1267 = vmatprep.subr.mxu0 0.0
    %1268 = vmatpush1.msra.mxu0 0.0
    %1269 = vmatprep.subr.mxu0 0.0
    %1270 = vmatpush1.msra.mxu0 0.0
    %1271 = vmatprep.subr.mxu0 0.0
    %1272 = vmatpush1.msra.mxu0 0.0
    %1273 = vmatprep.subr.mxu0 0.0
    %1274 = vmatpush1.msra.mxu0 0.0
    %1275 = vmatprep.mubr.f32.mxu0 0.0
    %1276 = vmatmul.mubr.f32.gmra.mrb[0].mxu0 %v1206
    %v1277 = vpop.f32.mrb[0].mxu0
    %v1278 = vadd.f32 0.0, %v1277
    %v1279 = vpop.f32.mrb[0].mxu0
    %1280 = vmatprep.mubr.f32.mxu0 0.0
    %1281 = vmatmul.mubr.f32.gmra.mrb[0].mxu0 %v1209
    %v1282 = vpop.f32.mrb[0].mxu0
    %v1283 = vadd.f32 0.0, %v1282
    %v1284 = vpop.f32.mrb[0].mxu0
    %1285 = vdwg.mxu0
    %v1286 = vld [vmem:[%s6 + $0x3] sm:$0x1]
    %1289 = vrot.lane.b32.xlu0 %v224, 96
    %v1290 = vpop.permute.xlu0 %1289
    %1291 = vrot.lane.b32.xlu0 %v229, 96
    %v1292 = vpop.permute.xlu0 %1291
    %v1294 = vsel %vm252, %v1278, 0
    %v1297 = vsel %vm252, %v1283, 0
    %v1299 = vsel %vm252, %v1290, 0
    %v1301 = vsel %vm252, %v1292, 0
    %1303 = vmatprep.subr.mxu0 0.0
    %1304 = vmatpush1.xpose.msra.mxu0 %v1299
    %1305 = vmatprep.subr.mxu0 0.0
    %1306 = vmatpush1.xpose.msra.mxu0 %v1301
    %1307 = vmatprep.subr.mxu0 0.0
    %1308 = vmatpush1.xpose.msra.mxu0 0.0
    %1309 = vmatprep.subr.mxu0 0.0
    %1310 = vmatpush1.xpose.msra.mxu0 0.0
    %1311 = vmatprep.subr.mxu0 0.0
    %1312 = vmatpush1.xpose.msra.mxu0 0.0
    %1313 = vmatprep.subr.mxu0 0.0
    %1314 = vmatpush1.xpose.msra.mxu0 0.0
    %1315 = vmatprep.subr.mxu0 0.0
    %1316 = vmatpush1.xpose.msra.mxu0 0.0
    %1317 = vmatprep.subr.mxu0 0.0
    %1318 = vmatpush1.xpose.msra.mxu0 0.0
    %1319 = vmatprep.subr.mxu0 0.0
    %1320 = vmatpush1.xpose.msra.mxu0 0.0
    %1321 = vmatprep.subr.mxu0 0.0
    %1322 = vmatpush1.xpose.msra.mxu0 0.0
    %1323 = vmatprep.subr.mxu0 0.0
    %1324 = vmatpush1.xpose.msra.mxu0 0.0
    %1325 = vmatprep.subr.mxu0 0.0
    %1326 = vmatpush1.xpose.msra.mxu0 0.0
    %1327 = vmatprep.subr.mxu0 0.0
    %1328 = vmatpush1.xpose.msra.mxu0 0.0
    %1329 = vmatprep.subr.mxu0 0.0
    %1330 = vmatpush1.xpose.msra.mxu0 0.0
    %1331 = vmatprep.subr.mxu0 0.0
    %1332 = vmatpush1.xpose.msra.mxu0 0.0
    %1333 = vmatprep.subr.mxu0 0.0
    %1334 = vmatpush1.xpose.msra.mxu0 0.0
    %1335 = vmatprep.subr.mxu0 0.0
    %1336 = vmatpush1.xpose.msra.mxu0 0.0
    %1337 = vmatprep.subr.mxu0 0.0
    %1338 = vmatpush1.xpose.msra.mxu0 0.0
    %1339 = vmatprep.subr.mxu0 0.0
    %1340 = vmatpush1.xpose.msra.mxu0 0.0
    %1341 = vmatprep.subr.mxu0 0.0
    %1342 = vmatpush1.xpose.msra.mxu0 0.0
    %1343 = vmatprep.subr.mxu0 0.0
    %1344 = vmatpush1.xpose.msra.mxu0 0.0
    %1345 = vmatprep.subr.mxu0 0.0
    %1346 = vmatpush1.xpose.msra.mxu0 0.0
    %1347 = vmatprep.subr.mxu0 0.0
    %1348 = vmatpush1.xpose.msra.mxu0 0.0
    %1349 = vmatprep.subr.mxu0 0.0
    %1350 = vmatpush1.xpose.msra.mxu0 0.0
    %1351 = vmatprep.subr.mxu0 0.0
    %1352 = vmatpush1.xpose.msra.mxu0 0.0
    %1353 = vmatprep.subr.mxu0 0.0
    %1354 = vmatpush1.xpose.msra.mxu0 0.0
    %1355 = vmatprep.subr.mxu0 0.0
    %1356 = vmatpush1.xpose.msra.mxu0 0.0
    %1357 = vmatprep.subr.mxu0 0.0
    %1358 = vmatpush1.xpose.msra.mxu0 0.0
    %1359 = vmatprep.subr.mxu0 0.0
    %1360 = vmatpush1.xpose.msra.mxu0 0.0
    %1361 = vmatprep.subr.mxu0 0.0
    %1362 = vmatpush1.xpose.msra.mxu0 0.0
    %1363 = vmatprep.subr.mxu0 0.0
    %1364 = vmatpush1.xpose.msra.mxu0 0.0
    %1365 = vmatprep.subr.mxu0 0.0
    %1366 = vmatpush1.xpose.msra.mxu0 0.0
    %1367 = vmatprep.mubr.f32.mxu0 0.0
    %1368 = vmatmul.mubr.f32.gmra.mrb[0].mxu0 %v1294
    %v1369 = vpop.f32.mrb[0].mxu0
    %v1370 = vadd.f32 %v117, %v1369
    %v1371 = vpop.f32.mrb[0].mxu0
    %1372 = vmatprep.mubr.f32.mxu0 0.0
    %1373 = vmatmul.mubr.f32.gmra.mrb[0].mxu0 %v1297
    %v1374 = vpop.f32.mrb[0].mxu0
    %v1375 = vadd.f32 %v118, %v1374
    %v1376 = vpop.f32.mrb[0].mxu0
    %1377 = vdwg.mxu0
    %1378 = vrot.lane.b32.xlu0 %v1278, 120
    %v1379 = vpop.permute.xlu0 %1378
    %1380 = vrot.lane.b32.xlu0 %v1283, 120
    %v1381 = vpop.permute.xlu0 %1380
    %1382 = vrot.lane.b32.xlu0 %v224, 88
    %v1383 = vpop.permute.xlu0 %1382
    %1384 = vrot.lane.b32.xlu0 %v229, 88
    %v1385 = vpop.permute.xlu0 %1384
    %v1386 = vsel %vm252, %v1379, 0
    %v1388 = vsel %vm252, %v1381, 0
    %v1390 = vsel %vm252, %v1383, 0
    %v1392 = vsel %vm252, %v1385, 0
    %1394 = vmatprep.subr.mxu0 0.0
    %1395 = vmatpush1.xpose.msra.mxu0 %v1390
    %1396 = vmatprep.subr.mxu0 0.0
    %1397 = vmatpush1.xpose.msra.mxu0 %v1392
    %1398 = vmatprep.subr.mxu0 0.0
    %1399 = vmatpush1.xpose.msra.mxu0 0.0
    %1400 = vmatprep.subr.mxu0 0.0
    %1401 = vmatpush1.xpose.msra.mxu0 0.0
    %1402 = vmatprep.subr.mxu0 0.0
    %1403 = vmatpush1.xpose.msra.mxu0 0.0
    %1404 = vmatprep.subr.mxu0 0.0
    %1405 = vmatpush1.xpose.msra.mxu0 0.0
    %1406 = vmatprep.subr.mxu0 0.0
    %1407 = vmatpush1.xpose.msra.mxu0 0.0
    %1408 = vmatprep.subr.mxu0 0.0
    %1409 = vmatpush1.xpose.msra.mxu0 0.0
    %1410 = vmatprep.subr.mxu0 0.0
    %1411 = vmatpush1.xpose.msra.mxu0 0.0
    %1412 = vmatprep.subr.mxu0 0.0
    %1413 = vmatpush1.xpose.msra.mxu0 0.0
    %1414 = vmatprep.subr.mxu0 0.0
    %1415 = vmatpush1.xpose.msra.mxu0 0.0
    %1416 = vmatprep.subr.mxu0 0.0
    %1417 = vmatpush1.xpose.msra.mxu0 0.0
    %1418 = vmatprep.subr.mxu0 0.0
    %1419 = vmatpush1.xpose.msra.mxu0 0.0
    %1420 = vmatprep.subr.mxu0 0.0
    %1421 = vmatpush1.xpose.msra.mxu0 0.0
    %1422 = vmatprep.subr.mxu0 0.0
    %1423 = vmatpush1.xpose.msra.mxu0 0.0
    %1424 = vmatprep.subr.mxu0 0.0
    %1425 = vmatpush1.xpose.msra.mxu0 0.0
    %1426 = vmatprep.subr.mxu0 0.0
    %1427 = vmatpush1.xpose.msra.mxu0 0.0
    %1428 = vmatprep.subr.mxu0 0.0
    %1429 = vmatpush1.xpose.msra.mxu0 0.0
    %1430 = vmatprep.subr.mxu0 0.0
    %1431 = vmatpush1.xpose.msra.mxu0 0.0
    %1432 = vmatprep.subr.mxu0 0.0
    %1433 = vmatpush1.xpose.msra.mxu0 0.0
    %1434 = vmatprep.subr.mxu0 0.0
    %1435 = vmatpush1.xpose.msra.mxu0 0.0
    %1436 = vmatprep.subr.mxu0 0.0
    %1437 = vmatpush1.xpose.msra.mxu0 0.0
    %1438 = vmatprep.subr.mxu0 0.0
    %1439 = vmatpush1.xpose.msra.mxu0 0.0
    %1440 = vmatprep.subr.mxu0 0.0
    %1441 = vmatpush1.xpose.msra.mxu0 0.0
    %1442 = vmatprep.subr.mxu0 0.0
    %1443 = vmatpush1.xpose.msra.mxu0 0.0
    %1444 = vmatprep.subr.mxu0 0.0
    %1445 = vmatpush1.xpose.msra.mxu0 0.0
    %1446 = vmatprep.subr.mxu0 0.0
    %1447 = vmatpush1.xpose.msra.mxu0 0.0
    %1448 = vmatprep.subr.mxu0 0.0
    %1449 = vmatpush1.xpose.msra.mxu0 0.0
    %1450 = vmatprep.subr.mxu0 0.0
    %1451 = vmatpush1.xpose.msra.mxu0 0.0
    %1452 = vmatprep.subr.mxu0 0.0
    %1453 = vmatpush1.xpose.msra.mxu0 0.0
    %1454 = vmatprep.subr.mxu0 0.0
    %1455 = vmatpush1.xpose.msra.mxu0 0.0
    %1456 = vmatprep.subr.mxu0 0.0
    %1457 = vmatpush1.xpose.msra.mxu0 0.0
    %1458 = vmatprep.mubr.f32.mxu0 0.0
    %1459 = vmatmul.mubr.f32.gmra.mrb[0].mxu0 %v1386
    %v1460 = vpop.f32.mrb[0].mxu0
    %v1461 = vadd.f32 %v117, %v1460
    %v1462 = vpop.f32.mrb[0].mxu0
    %1463 = vmatprep.mubr.f32.mxu0 0.0
    %1464 = vmatmul.mubr.f32.gmra.mrb[0].mxu0 %v1388
    %v1465 = vpop.f32.mrb[0].mxu0
    %v1466 = vadd.f32 %v118, %v1465
    %v1467 = vpop.f32.mrb[0].mxu0
    %1468 = vdwg.mxu0
    %1469 = vrot.lane.b32.xlu0 %v1278, 112
    %v1470 = vpop.permute.xlu0 %1469
    %1471 = vrot.lane.b32.xlu0 %v1283, 112
    %v1472 = vpop.permute.xlu0 %1471
    %1473 = vrot.lane.b32.xlu0 %v224, 80
    %v1474 = vpop.permute.xlu0 %1473
    %1475 = vrot.lane.b32.xlu0 %v229, 80
    %v1476 = vpop.permute.xlu0 %1475
    %v1477 = vsel %vm252, %v1470, 0
    %v1479 = vsel %vm252, %v1472, 0
    %v1481 = vsel %vm252, %v1474, 0
    %v1483 = vsel %vm252, %v1476, 0
    %1485 = vmatprep.subr.mxu0 0.0
    %1486 = vmatpush1.xpose.msra.mxu0 %v1481
    %1487 = vmatprep.subr.mxu0 0.0
    %1488 = vmatpush1.xpose.msra.mxu0 %v1483
    %1489 = vmatprep.subr.mxu0 0.0
    %1490 = vmatpush1.xpose.msra.mxu0 0.0
    %1491 = vmatprep.subr.mxu0 0.0
    %1492 = vmatpush1.xpose.msra.mxu0 0.0
    %1493 = vmatprep.subr.mxu0 0.0
    %1494 = vmatpush1.xpose.msra.mxu0 0.0
    %1495 = vmatprep.subr.mxu0 0.0
    %1496 = vmatpush1.xpose.msra.mxu0 0.0
    %1497 = vmatprep.subr.mxu0 0.0
    %1498 = vmatpush1.xpose.msra.mxu0 0.0
    %1499 = vmatprep.subr.mxu0 0.0
    %1500 = vmatpush1.xpose.msra.mxu0 0.0
    %1501 = vmatprep.subr.mxu0 0.0
    %1502 = vmatpush1.xpose.msra.mxu0 0.0
    %1503 = vmatprep.subr.mxu0 0.0
    %1504 = vmatpush1.xpose.msra.mxu0 0.0
    %1505 = vmatprep.subr.mxu0 0.0
    %1506 = vmatpush1.xpose.msra.mxu0 0.0
    %1507 = vmatprep.subr.mxu0 0.0
    %1508 = vmatpush1.xpose.msra.mxu0 0.0
    %1509 = vmatprep.subr.mxu0 0.0
    %1510 = vmatpush1.xpose.msra.mxu0 0.0
    %1511 = vmatprep.subr.mxu0 0.0
    %1512 = vmatpush1.xpose.msra.mxu0 0.0
    %1513 = vmatprep.subr.mxu0 0.0
    %1514 = vmatpush1.xpose.msra.mxu0 0.0
    %1515 = vmatprep.subr.mxu0 0.0
    %1516 = vmatpush1.xpose.msra.mxu0 0.0
    %1517 = vmatprep.subr.mxu0 0.0
    %1518 = vmatpush1.xpose.msra.mxu0 0.0
    %1519 = vmatprep.subr.mxu0 0.0
    %1520 = vmatpush1.xpose.msra.mxu0 0.0
    %1521 = vmatprep.subr.mxu0 0.0
    %1522 = vmatpush1.xpose.msra.mxu0 0.0
    %1523 = vmatprep.subr.mxu0 0.0
    %1524 = vmatpush1.xpose.msra.mxu0 0.0
    %1525 = vmatprep.subr.mxu0 0.0
    %1526 = vmatpush1.xpose.msra.mxu0 0.0
    %1527 = vmatprep.subr.mxu0 0.0
    %1528 = vmatpush1.xpose.msra.mxu0 0.0
    %1529 = vmatprep.subr.mxu0 0.0
    %1530 = vmatpush1.xpose.msra.mxu0 0.0
    %1531 = vmatprep.subr.mxu0 0.0
    %1532 = vmatpush1.xpose.msra.mxu0 0.0
    %1533 = vmatprep.subr.mxu0 0.0
    %1534 = vmatpush1.xpose.msra.mxu0 0.0
    %1535 = vmatprep.subr.mxu0 0.0
    %1536 = vmatpush1.xpose.msra.mxu0 0.0
    %1537 = vmatprep.subr.mxu0 0.0
    %1538 = vmatpush1.xpose.msra.mxu0 0.0
    %1539 = vmatprep.subr.mxu0 0.0
    %1540 = vmatpush1.xpose.msra.mxu0 0.0
    %1541 = vmatprep.subr.mxu0 0.0
    %1542 = vmatpush1.xpose.msra.mxu0 0.0
    %1543 = vmatprep.subr.mxu0 0.0
    %1544 = vmatpush1.xpose.msra.mxu0 0.0
    %1545 = vmatprep.subr.mxu0 0.0
    %1546 = vmatpush1.xpose.msra.mxu0 0.0
    %1547 = vmatprep.subr.mxu0 0.0
    %1548 = vmatpush1.xpose.msra.mxu0 0.0
    %1549 = vmatprep.mubr.f32.mxu0 0.0
    %1550 = vmatmul.mubr.f32.gmra.mrb[0].mxu0 %v1477
    %v1551 = vpop.f32.mrb[0].mxu0
    %v1552 = vadd.f32 %v117, %v1551
    %v1553 = vpop.f32.mrb[0].mxu0
    %1554 = vmatprep.mubr.f32.mxu0 0.0
    %1555 = vmatmul.mubr.f32.gmra.mrb[0].mxu0 %v1479
    %v1556 = vpop.f32.mrb[0].mxu0
    %v1557 = vadd.f32 %v118, %v1556
    %v1558 = vpop.f32.mrb[0].mxu0
    %1559 = vdwg.mxu0
    %1560 = vrot.lane.b32.xlu0 %v1278, 104
    %v1561 = vpop.permute.xlu0 %1560
    %1562 = vrot.lane.b32.xlu0 %v1283, 104
    %v1563 = vpop.permute.xlu0 %1562
    %1564 = vrot.lane.b32.xlu0 %v224, 72
    %v1565 = vpop.permute.xlu0 %1564
    %1566 = vrot.lane.b32.xlu0 %v229, 72
    %v1567 = vpop.permute.xlu0 %1566
    %v1568 = vsel %vm252, %v1561, 0
    %v1570 = vsel %vm252, %v1563, 0
    %v1572 = vsel %vm252, %v1565, 0
    %v1574 = vsel %vm252, %v1567, 0
    %1576 = vmatprep.subr.mxu0 0.0
    %1577 = vmatpush1.xpose.msra.mxu0 %v1572
    %1578 = vmatprep.subr.mxu0 0.0
    %1579 = vmatpush1.xpose.msra.mxu0 %v1574
    %1580 = vmatprep.subr.mxu0 0.0
    %1581 = vmatpush1.xpose.msra.mxu0 0.0
    %1582 = vmatprep.subr.mxu0 0.0
    %1583 = vmatpush1.xpose.msra.mxu0 0.0
    %1584 = vmatprep.subr.mxu0 0.0
    %1585 = vmatpush1.xpose.msra.mxu0 0.0
    %1586 = vmatprep.subr.mxu0 0.0
    %1587 = vmatpush1.xpose.msra.mxu0 0.0
    %1588 = vmatprep.subr.mxu0 0.0
    %1589 = vmatpush1.xpose.msra.mxu0 0.0
    %1590 = vmatprep.subr.mxu0 0.0
    %1591 = vmatpush1.xpose.msra.mxu0 0.0
    %1592 = vmatprep.subr.mxu0 0.0
    %1593 = vmatpush1.xpose.msra.mxu0 0.0
    %1594 = vmatprep.subr.mxu0 0.0
    %1595 = vmatpush1.xpose.msra.mxu0 0.0
    %1596 = vmatprep.subr.mxu0 0.0
    %1597 = vmatpush1.xpose.msra.mxu0 0.0
    %1598 = vmatprep.subr.mxu0 0.0
    %1599 = vmatpush1.xpose.msra.mxu0 0.0
    %1600 = vmatprep.subr.mxu0 0.0
    %1601 = vmatpush1.xpose.msra.mxu0 0.0
    %1602 = vmatprep.subr.mxu0 0.0
    %1603 = vmatpush1.xpose.msra.mxu0 0.0
    %1604 = vmatprep.subr.mxu0 0.0
    %1605 = vmatpush1.xpose.msra.mxu0 0.0
    %1606 = vmatprep.subr.mxu0 0.0
    %1607 = vmatpush1.xpose.msra.mxu0 0.0
    %1608 = vmatprep.subr.mxu0 0.0
    %1609 = vmatpush1.xpose.msra.mxu0 0.0
    %1610 = vmatprep.subr.mxu0 0.0
    %1611 = vmatpush1.xpose.msra.mxu0 0.0
    %1612 = vmatprep.subr.mxu0 0.0
    %1613 = vmatpush1.xpose.msra.mxu0 0.0
    %1614 = vmatprep.subr.mxu0 0.0
    %1615 = vmatpush1.xpose.msra.mxu0 0.0
    %1616 = vmatprep.subr.mxu0 0.0
    %1617 = vmatpush1.xpose.msra.mxu0 0.0
    %1618 = vmatprep.subr.mxu0 0.0
    %1619 = vmatpush1.xpose.msra.mxu0 0.0
    %1620 = vmatprep.subr.mxu0 0.0
    %1621 = vmatpush1.xpose.msra.mxu0 0.0
    %1622 = vmatprep.subr.mxu0 0.0
    %1623 = vmatpush1.xpose.msra.mxu0 0.0
    %1624 = vmatprep.subr.mxu0 0.0
    %1625 = vmatpush1.xpose.msra.mxu0 0.0
    %1626 = vmatprep.subr.mxu0 0.0
    %1627 = vmatpush1.xpose.msra.mxu0 0.0
    %1628 = vmatprep.subr.mxu0 0.0
    %1629 = vmatpush1.xpose.msra.mxu0 0.0
    %1630 = vmatprep.subr.mxu0 0.0
    %1631 = vmatpush1.xpose.msra.mxu0 0.0
    %1632 = vmatprep.subr.mxu0 0.0
    %1633 = vmatpush1.xpose.msra.mxu0 0.0
    %1634 = vmatprep.subr.mxu0 0.0
    %1635 = vmatpush1.xpose.msra.mxu0 0.0
    %1636 = vmatprep.subr.mxu0 0.0
    %1637 = vmatpush1.xpose.msra.mxu0 0.0
    %1638 = vmatprep.subr.mxu0 0.0
    %1639 = vmatpush1.xpose.msra.mxu0 0.0
    %1640 = vmatprep.mubr.f32.mxu0 0.0
    %1641 = vmatmul.mubr.f32.gmra.mrb[0].mxu0 %v1568
    %v1642 = vpop.f32.mrb[0].mxu0
    %v1643 = vadd.f32 %v117, %v1642
    %v1644 = vpop.f32.mrb[0].mxu0
    %1645 = vmatprep.mubr.f32.mxu0 0.0
    %1646 = vmatmul.mubr.f32.gmra.mrb[0].mxu0 %v1570
    %v1647 = vpop.f32.mrb[0].mxu0
    %v1648 = vadd.f32 %v118, %v1647
    %v1649 = vpop.f32.mrb[0].mxu0
    %1650 = vdwg.mxu0
    %v1651 = vsel %vm609, %v1370, -inf
    %1652 = vmax.xlane.f32.xlu0 %v1651
    %v1653 = vpop.xlane.xlu0 %1652
    %v1654 = vsel %vm609, %v1375, -inf
    %1655 = vmax.xlane.f32.xlu0 %v1654
    %v1656 = vpop.xlane.xlu0 %1655
    %v1657 = vsel %vm609, %v1461, -inf
    %1658 = vmax.xlane.f32.xlu0 %v1657
    %v1659 = vpop.xlane.xlu0 %1658
    %v1660 = vsel %vm609, %v1466, -inf
    %1661 = vmax.xlane.f32.xlu0 %v1660
    %v1662 = vpop.xlane.xlu0 %1661
    %v1663 = vsel %vm609, %v1552, -inf
    %1664 = vmax.xlane.f32.xlu0 %v1663
    %v1665 = vpop.xlane.xlu0 %1664
    %v1666 = vsel %vm609, %v1557, -inf
    %1667 = vmax.xlane.f32.xlu0 %v1666
    %v1668 = vpop.xlane.xlu0 %1667
    %v1669 = vsel %vm609, %v1643, -inf
    %1670 = vmax.xlane.f32.xlu0 %v1669
    %v1671 = vpop.xlane.xlu0 %1670
    %v1672 = vsel %vm609, %v1648, -inf
    %1673 = vmax.xlane.f32.xlu0 %v1672
    %v1674 = vpop.xlane.xlu0 %1673
    %v1675 = vsub.f32 %v1370, %v1653
    %v1676 = vsub.f32 %v1375, %v1656
    %v1677 = vsub.f32 %v1461, %v1659
    %v1678 = vsub.f32 %v1466, %v1662
    %v1679 = vsub.f32 %v1552, %v1665
    %v1680 = vsub.f32 %v1557, %v1668
    %v1681 = vsub.f32 %v1643, %v1671
    %v1682 = vsub.f32 %v1648, %v1674
    %v1683 = vmul.f32 %v1675, 1.442695
    %v1684 = vpow.pop %v1683
    %v1685 = vmul.f32 %v1676, 1.442695
    %v1686 = vpow.pop %v1685
    %v1687 = vmul.f32 %v1677, 1.442695
    %v1688 = vpow.pop %v1687
    %v1689 = vmul.f32 %v1678, 1.442695
    %v1690 = vpow.pop %v1689
    %v1691 = vmul.f32 %v1679, 1.442695
    %v1692 = vpow.pop %v1691
    %v1693 = vmul.f32 %v1680, 1.442695
    %v1694 = vpow.pop %v1693
    %v1695 = vmul.f32 %v1681, 1.442695
    %v1696 = vpow.pop %v1695
    %v1697 = vmul.f32 %v1682, 1.442695
    %v1698 = vpow.pop %v1697
    %v1699 = vsel %vm609, %v1684, 0.0
    %1700 = vadd.xlane.f32.xlu0 %v1699
    %v1701 = vpop.xlane.xlu0 %1700
    %v1702 = vsel %vm609, %v1686, 0.0
    %1703 = vadd.xlane.f32.xlu0 %v1702
    %v1704 = vpop.xlane.xlu0 %1703
    %v1705 = vsel %vm609, %v1688, 0.0
    %1706 = vadd.xlane.f32.xlu0 %v1705
    %v1707 = vpop.xlane.xlu0 %1706
    %v1708 = vsel %vm609, %v1690, 0.0
    %1709 = vadd.xlane.f32.xlu0 %v1708
    %v1710 = vpop.xlane.xlu0 %1709
    %v1711 = vsel %vm609, %v1692, 0.0
    %1712 = vadd.xlane.f32.xlu0 %v1711
    %v1713 = vpop.xlane.xlu0 %1712
    %v1714 = vsel %vm609, %v1694, 0.0
    %1715 = vadd.xlane.f32.xlu0 %v1714
    %v1716 = vpop.xlane.xlu0 %1715
    %v1717 = vsel %vm609, %v1696, 0.0
    %1718 = vadd.xlane.f32.xlu0 %v1717
    %v1719 = vpop.xlane.xlu0 %1718
    %v1720 = vsel %vm609, %v1698, 0.0
    %1721 = vadd.xlane.f32.xlu0 %v1720
    %v1722 = vpop.xlane.xlu0 %1721
    %v1723 = vrcp.pop %v1701
    %v1724 = vrcp.pop %v1704
    %v1725 = vrcp.pop %v1707
    %v1726 = vrcp.pop %v1710
    %v1727 = vrcp.pop %v1713
    %v1728 = vrcp.pop %v1716
    %v1729 = vrcp.pop %v1719
    %v1730 = vrcp.pop %v1722
    %v1731 = vmul.f32 %v1684, %v1723
    %v1732 = vmul.f32 %v1686, %v1724
    %v1733 = vmul.f32 %v1688, %v1725
    %v1734 = vmul.f32 %v1690, %v1726
    %v1735 = vmul.f32 %v1692, %v1727
    %v1736 = vmul.f32 %v1694, %v1728
    %v1737 = vmul.f32 %v1696, %v1729
    %v1738 = vmul.f32 %v1698, %v1730
    %1741 = vrot.lane.b32.xlu0 %v234, 64
    %v1742 = vpop.permute.xlu0 %1741
    %1743 = vrot.lane.b32.xlu0 %v239, 64
    %v1744 = vpop.permute.xlu0 %1743
    %v1748 = vsel %vm609, %v1731, 0
    %v1751 = vsel %vm609, %v1732, 0
    %1753 = vmatprep.subr.mxu0 0.0
    %1754 = vmatpush1.msra.mxu0 %v1742
    %1755 = vmatprep.subr.mxu0 0.0
    %1756 = vmatpush1.msra.mxu0 %v1744
    %1757 = vmatprep.subr.mxu0 0.0
    %1758 = vmatpush1.msra.mxu0 0.0
    %1759 = vmatprep.subr.mxu0 0.0
    %1760 = vmatpush1.msra.mxu0 0.0
    %1761 = vmatprep.subr.mxu0 0.0
    %1762 = vmatpush1.msra.mxu0 0.0
    %1763 = vmatprep.subr.mxu0 0.0
    %1764 = vmatpush1.msra.mxu0 0.0
    %1765 = vmatprep.subr.mxu0 0.0
    %1766 = vmatpush1.msra.mxu0 0.0
    %1767 = vmatprep.subr.mxu0 0.0
    %1768 = vmatpush1.msra.mxu0 0.0
    %1769 = vmatprep.subr.mxu0 0.0
    %1770 = vmatpush1.msra.mxu0 0.0
    %1771 = vmatprep.subr.mxu0 0.0
    %1772 = vmatpush1.msra.mxu0 0.0
    %1773 = vmatprep.subr.mxu0 0.0
    %1774 = vmatpush1.msra.mxu0 0.0
    %1775 = vmatprep.subr.mxu0 0.0
    %1776 = vmatpush1.msra.mxu0 0.0
    %1777 = vmatprep.subr.mxu0 0.0
    %1778 = vmatpush1.msra.mxu0 0.0
    %1779 = vmatprep.subr.mxu0 0.0
    %1780 = vmatpush1.msra.mxu0 0.0
    %1781 = vmatprep.subr.mxu0 0.0
    %1782 = vmatpush1.msra.mxu0 0.0
    %1783 = vmatprep.subr.mxu0 0.0
    %1784 = vmatpush1.msra.mxu0 0.0
    %1785 = vmatprep.subr.mxu0 0.0
    %1786 = vmatpush1.msra.mxu0 0.0
    %1787 = vmatprep.subr.mxu0 0.0
    %1788 = vmatpush1.msra.mxu0 0.0
    %1789 = vmatprep.subr.mxu0 0.0
    %1790 = vmatpush1.msra.mxu0 0.0
    %1791 = vmatprep.subr.mxu0 0.0
    %1792 = vmatpush1.msra.mxu0 0.0
    %1793 = vmatprep.subr.mxu0 0.0
    %1794 = vmatpush1.msra.mxu0 0.0
    %1795 = vmatprep.subr.mxu0 0.0
    %1796 = vmatpush1.msra.mxu0 0.0
    %1797 = vmatprep.subr.mxu0 0.0
    %1798 = vmatpush1.msra.mxu0 0.0
    %1799 = vmatprep.subr.mxu0 0.0
    %1800 = vmatpush1.msra.mxu0 0.0
    %1801 = vmatprep.subr.mxu0 0.0
    %1802 = vmatpush1.msra.mxu0 0.0
    %1803 = vmatprep.subr.mxu0 0.0
    %1804 = vmatpush1.msra.mxu0 0.0
    %1805 = vmatprep.subr.mxu0 0.0
    %1806 = vmatpush1.msra.mxu0 0.0
    %1807 = vmatprep.subr.mxu0 0.0
    %1808 = vmatpush1.msra.mxu0 0.0
    %1809 = vmatprep.subr.mxu0 0.0
    %1810 = vmatpush1.msra.mxu0 0.0
    %1811 = vmatprep.subr.mxu0 0.0
    %1812 = vmatpush1.msra.mxu0 0.0
    %1813 = vmatprep.subr.mxu0 0.0
    %1814 = vmatpush1.msra.mxu0 0.0
    %1815 = vmatprep.subr.mxu0 0.0
    %1816 = vmatpush1.msra.mxu0 0.0
    %1817 = vmatprep.mubr.f32.mxu0 0.0
    %1818 = vmatmul.mubr.f32.gmra.mrb[0].mxu0 %v1748
    %v1819 = vpop.f32.mrb[0].mxu0
    %v1820 = vadd.f32 0.0, %v1819
    %v1821 = vpop.f32.mrb[0].mxu0
    %1822 = vmatprep.mubr.f32.mxu0 0.0
    %1823 = vmatmul.mubr.f32.gmra.mrb[0].mxu0 %v1751
    %v1824 = vpop.f32.mrb[0].mxu0
    %v1825 = vadd.f32 0.0, %v1824
    %v1826 = vpop.f32.mrb[0].mxu0
    %1827 = vdwg.mxu0
    %1828 = vrot.lane.b32.xlu0 %v234, 56
    %v1829 = vpop.permute.xlu0 %1828
    %1830 = vrot.lane.b32.xlu0 %v239, 56
    %v1831 = vpop.permute.xlu0 %1830
    %v1835 = vsel %vm609, %v1733, 0
    %v1838 = vsel %vm609, %v1734, 0
    %1840 = vmatprep.subr.mxu0 0.0
    %1841 = vmatpush1.msra.mxu0 %v1829
    %1842 = vmatprep.subr.mxu0 0.0
    %1843 = vmatpush1.msra.mxu0 %v1831
    %1844 = vmatprep.subr.mxu0 0.0
    %1845 = vmatpush1.msra.mxu0 0.0
    %1846 = vmatprep.subr.mxu0 0.0
    %1847 = vmatpush1.msra.mxu0 0.0
    %1848 = vmatprep.subr.mxu0 0.0
    %1849 = vmatpush1.msra.mxu0 0.0
    %1850 = vmatprep.subr.mxu0 0.0
    %1851 = vmatpush1.msra.mxu0 0.0
    %1852 = vmatprep.subr.mxu0 0.0
    %1853 = vmatpush1.msra.mxu0 0.0
    %1854 = vmatprep.subr.mxu0 0.0
    %1855 = vmatpush1.msra.mxu0 0.0
    %1856 = vmatprep.subr.mxu0 0.0
    %1857 = vmatpush1.msra.mxu0 0.0
    %1858 = vmatprep.subr.mxu0 0.0
    %1859 = vmatpush1.msra.mxu0 0.0
    %1860 = vmatprep.subr.mxu0 0.0
    %1861 = vmatpush1.msra.mxu0 0.0
    %1862 = vmatprep.subr.mxu0 0.0
    %1863 = vmatpush1.msra.mxu0 0.0
    %1864 = vmatprep.subr.mxu0 0.0
    %1865 = vmatpush1.msra.mxu0 0.0
    %1866 = vmatprep.subr.mxu0 0.0
    %1867 = vmatpush1.msra.mxu0 0.0
    %1868 = vmatprep.subr.mxu0 0.0
    %1869 = vmatpush1.msra.mxu0 0.0
    %1870 = vmatprep.subr.mxu0 0.0
    %1871 = vmatpush1.msra.mxu0 0.0
    %1872 = vmatprep.subr.mxu0 0.0
    %1873 = vmatpush1.msra.mxu0 0.0
    %1874 = vmatprep.subr.mxu0 0.0
    %1875 = vmatpush1.msra.mxu0 0.0
    %1876 = vmatprep.subr.mxu0 0.0
    %1877 = vmatpush1.msra.mxu0 0.0
    %1878 = vmatprep.subr.mxu0 0.0
    %1879 = vmatpush1.msra.mxu0 0.0
    %1880 = vmatprep.subr.mxu0 0.0
    %1881 = vmatpush1.msra.mxu0 0.0
    %1882 = vmatprep.subr.mxu0 0.0
    %1883 = vmatpush1.msra.mxu0 0.0
    %1884 = vmatprep.subr.mxu0 0.0
    %1885 = vmatpush1.msra.mxu0 0.0
    %1886 = vmatprep.subr.mxu0 0.0
    %1887 = vmatpush1.msra.mxu0 0.0
    %1888 = vmatprep.subr.mxu0 0.0
    %1889 = vmatpush1.msra.mxu0 0.0
    %1890 = vmatprep.subr.mxu0 0.0
    %1891 = vmatpush1.msra.mxu0 0.0
    %1892 = vmatprep.subr.mxu0 0.0
    %1893 = vmatpush1.msra.mxu0 0.0
    %1894 = vmatprep.subr.mxu0 0.0
    %1895 = vmatpush1.msra.mxu0 0.0
    %1896 = vmatprep.subr.mxu0 0.0
    %1897 = vmatpush1.msra.mxu0 0.0
    %1898 = vmatprep.subr.mxu0 0.0
    %1899 = vmatpush1.msra.mxu0 0.0
    %1900 = vmatprep.subr.mxu0 0.0
    %1901 = vmatpush1.msra.mxu0 0.0
    %1902 = vmatprep.subr.mxu0 0.0
    %1903 = vmatpush1.msra.mxu0 0.0
    %1904 = vmatprep.mubr.f32.mxu0 0.0
    %1905 = vmatmul.mubr.f32.gmra.mrb[0].mxu0 %v1835
    %v1906 = vpop.f32.mrb[0].mxu0
    %v1907 = vadd.f32 0.0, %v1906
    %v1908 = vpop.f32.mrb[0].mxu0
    %1909 = vmatprep.mubr.f32.mxu0 0.0
    %1910 = vmatmul.mubr.f32.gmra.mrb[0].mxu0 %v1838
    %v1911 = vpop.f32.mrb[0].mxu0
    %v1912 = vadd.f32 0.0, %v1911
    %v1913 = vpop.f32.mrb[0].mxu0
    %1914 = vdwg.mxu0
    %1915 = vrot.lane.b32.xlu0 %v234, 48
    %v1916 = vpop.permute.xlu0 %1915
    %1917 = vrot.lane.b32.xlu0 %v239, 48
    %v1918 = vpop.permute.xlu0 %1917
    %v1922 = vsel %vm609, %v1735, 0
    %v1925 = vsel %vm609, %v1736, 0
    %1927 = vmatprep.subr.mxu0 0.0
    %1928 = vmatpush1.msra.mxu0 %v1916
    %1929 = vmatprep.subr.mxu0 0.0
    %1930 = vmatpush1.msra.mxu0 %v1918
    %1931 = vmatprep.subr.mxu0 0.0
    %1932 = vmatpush1.msra.mxu0 0.0
    %1933 = vmatprep.subr.mxu0 0.0
    %1934 = vmatpush1.msra.mxu0 0.0
    %1935 = vmatprep.subr.mxu0 0.0
    %1936 = vmatpush1.msra.mxu0 0.0
    %1937 = vmatprep.subr.mxu0 0.0
    %1938 = vmatpush1.msra.mxu0 0.0
    %1939 = vmatprep.subr.mxu0 0.0
    %1940 = vmatpush1.msra.mxu0 0.0
    %1941 = vmatprep.subr.mxu0 0.0
    %1942 = vmatpush1.msra.mxu0 0.0
    %1943 = vmatprep.subr.mxu0 0.0
    %1944 = vmatpush1.msra.mxu0 0.0
    %1945 = vmatprep.subr.mxu0 0.0
    %1946 = vmatpush1.msra.mxu0 0.0
    %1947 = vmatprep.subr.mxu0 0.0
    %1948 = vmatpush1.msra.mxu0 0.0
    %1949 = vmatprep.subr.mxu0 0.0
    %1950 = vmatpush1.msra.mxu0 0.0
    %1951 = vmatprep.subr.mxu0 0.0
    %1952 = vmatpush1.msra.mxu0 0.0
    %1953 = vmatprep.subr.mxu0 0.0
    %1954 = vmatpush1.msra.mxu0 0.0
    %1955 = vmatprep.subr.mxu0 0.0
    %1956 = vmatpush1.msra.mxu0 0.0
    %1957 = vmatprep.subr.mxu0 0.0
    %1958 = vmatpush1.msra.mxu0 0.0
    %1959 = vmatprep.subr.mxu0 0.0
    %1960 = vmatpush1.msra.mxu0 0.0
    %1961 = vmatprep.subr.mxu0 0.0
    %1962 = vmatpush1.msra.mxu0 0.0
    %1963 = vmatprep.subr.mxu0 0.0
    %1964 = vmatpush1.msra.mxu0 0.0
    %1965 = vmatprep.subr.mxu0 0.0
    %1966 = vmatpush1.msra.mxu0 0.0
    %1967 = vmatprep.subr.mxu0 0.0
    %1968 = vmatpush1.msra.mxu0 0.0
    %1969 = vmatprep.subr.mxu0 0.0
    %1970 = vmatpush1.msra.mxu0 0.0
    %1971 = vmatprep.subr.mxu0 0.0
    %1972 = vmatpush1.msra.mxu0 0.0
    %1973 = vmatprep.subr.mxu0 0.0
    %1974 = vmatpush1.msra.mxu0 0.0
    %1975 = vmatprep.subr.mxu0 0.0
    %1976 = vmatpush1.msra.mxu0 0.0
    %1977 = vmatprep.subr.mxu0 0.0
    %1978 = vmatpush1.msra.mxu0 0.0
    %1979 = vmatprep.subr.mxu0 0.0
    %1980 = vmatpush1.msra.mxu0 0.0
    %1981 = vmatprep.subr.mxu0 0.0
    %1982 = vmatpush1.msra.mxu0 0.0
    %1983 = vmatprep.subr.mxu0 0.0
    %1984 = vmatpush1.msra.mxu0 0.0
    %1985 = vmatprep.subr.mxu0 0.0
    %1986 = vmatpush1.msra.mxu0 0.0
    %1987 = vmatprep.subr.mxu0 0.0
    %1988 = vmatpush1.msra.mxu0 0.0
    %1989 = vmatprep.subr.mxu0 0.0
    %1990 = vmatpush1.msra.mxu0 0.0
    %1991 = vmatprep.mubr.f32.mxu0 0.0
    %1992 = vmatmul.mubr.f32.gmra.mrb[0].mxu0 %v1922
    %v1993 = vpop.f32.mrb[0].mxu0
    %v1994 = vadd.f32 0.0, %v1993
    %v1995 = vpop.f32.mrb[0].mxu0
    %1996 = vmatprep.mubr.f32.mxu0 0.0
    %1997 = vmatmul.mubr.f32.gmra.mrb[0].mxu0 %v1925
    %v1998 = vpop.f32.mrb[0].mxu0
    %v1999 = vadd.f32 0.0, %v1998
    %v2000 = vpop.f32.mrb[0].mxu0
    %2001 = vdwg.mxu0
    %2002 = vrot.lane.b32.xlu0 %v234, 40
    %v2003 = vpop.permute.xlu0 %2002
    %2004 = vrot.lane.b32.xlu0 %v239, 40
    %v2005 = vpop.permute.xlu0 %2004
    %v2009 = vsel %vm609, %v1737, 0
    %v2012 = vsel %vm609, %v1738, 0
    %2014 = vmatprep.subr.mxu0 0.0
    %2015 = vmatpush1.msra.mxu0 %v2003
    %2016 = vmatprep.subr.mxu0 0.0
    %2017 = vmatpush1.msra.mxu0 %v2005
    %2018 = vmatprep.subr.mxu0 0.0
    %2019 = vmatpush1.msra.mxu0 0.0
    %2020 = vmatprep.subr.mxu0 0.0
    %2021 = vmatpush1.msra.mxu0 0.0
    %2022 = vmatprep.subr.mxu0 0.0
    %2023 = vmatpush1.msra.mxu0 0.0
    %2024 = vmatprep.subr.mxu0 0.0
    %2025 = vmatpush1.msra.mxu0 0.0
    %2026 = vmatprep.subr.mxu0 0.0
    %2027 = vmatpush1.msra.mxu0 0.0
    %2028 = vmatprep.subr.mxu0 0.0
    %2029 = vmatpush1.msra.mxu0 0.0
    %2030 = vmatprep.subr.mxu0 0.0
    %2031 = vmatpush1.msra.mxu0 0.0
    %2032 = vmatprep.subr.mxu0 0.0
    %2033 = vmatpush1.msra.mxu0 0.0
    %2034 = vmatprep.subr.mxu0 0.0
    %2035 = vmatpush1.msra.mxu0 0.0
    %2036 = vmatprep.subr.mxu0 0.0
    %2037 = vmatpush1.msra.mxu0 0.0
    %2038 = vmatprep.subr.mxu0 0.0
    %2039 = vmatpush1.msra.mxu0 0.0
    %2040 = vmatprep.subr.mxu0 0.0
    %2041 = vmatpush1.msra.mxu0 0.0
    %2042 = vmatprep.subr.mxu0 0.0
    %2043 = vmatpush1.msra.mxu0 0.0
    %2044 = vmatprep.subr.mxu0 0.0
    %2045 = vmatpush1.msra.mxu0 0.0
    %2046 = vmatprep.subr.mxu0 0.0
    %2047 = vmatpush1.msra.mxu0 0.0
    %2048 = vmatprep.subr.mxu0 0.0
    %2049 = vmatpush1.msra.mxu0 0.0
    %2050 = vmatprep.subr.mxu0 0.0
    %2051 = vmatpush1.msra.mxu0 0.0
    %2052 = vmatprep.subr.mxu0 0.0
    %2053 = vmatpush1.msra.mxu0 0.0
    %2054 = vmatprep.subr.mxu0 0.0
    %2055 = vmatpush1.msra.mxu0 0.0
    %2056 = vmatprep.subr.mxu0 0.0
    %2057 = vmatpush1.msra.mxu0 0.0
    %2058 = vmatprep.subr.mxu0 0.0
    %2059 = vmatpush1.msra.mxu0 0.0
    %2060 = vmatprep.subr.mxu0 0.0
    %2061 = vmatpush1.msra.mxu0 0.0
    %2062 = vmatprep.subr.mxu0 0.0
    %2063 = vmatpush1.msra.mxu0 0.0
    %2064 = vmatprep.subr.mxu0 0.0
    %2065 = vmatpush1.msra.mxu0 0.0
    %2066 = vmatprep.subr.mxu0 0.0
    %2067 = vmatpush1.msra.mxu0 0.0
    %2068 = vmatprep.subr.mxu0 0.0
    %2069 = vmatpush1.msra.mxu0 0.0
    %2070 = vmatprep.subr.mxu0 0.0
    %2071 = vmatpush1.msra.mxu0 0.0
    %2072 = vmatprep.subr.mxu0 0.0
    %2073 = vmatpush1.msra.mxu0 0.0
    %2074 = vmatprep.subr.mxu0 0.0
    %2075 = vmatpush1.msra.mxu0 0.0
    %2076 = vmatprep.subr.mxu0 0.0
    %2077 = vmatpush1.msra.mxu0 0.0
    %2078 = vmatprep.mubr.f32.mxu0 0.0
    %2079 = vmatmul.mubr.f32.gmra.mrb[0].mxu0 %v2009
    %v2080 = vpop.f32.mrb[0].mxu0
    %v2081 = vadd.f32 0.0, %v2080
    %v2082 = vpop.f32.mrb[0].mxu0
    %2083 = vmatprep.mubr.f32.mxu0 0.0
    %2084 = vmatmul.mubr.f32.gmra.mrb[0].mxu0 %v2012
    %v2085 = vpop.f32.mrb[0].mxu0
    %v2086 = vadd.f32 0.0, %v2085
    %v2087 = vpop.f32.mrb[0].mxu0
    %2088 = vdwg.mxu0
    %2091 = vrot.lane.b32.xlu0 %v1907, 8
    %v2092 = vpop.permute.xlu0 %2091
    %2093 = vrot.lane.b32.xlu0 %v1912, 8
    %v2094 = vpop.permute.xlu0 %2093
    %2099 = vrot.lane.b32.xlu0 %v1994, 16
    %v2100 = vpop.permute.xlu0 %2099
    %2101 = vrot.lane.b32.xlu0 %v1999, 16
    %v2102 = vpop.permute.xlu0 %2101
    %2107 = vrot.lane.b32.xlu0 %v2081, 24
    %v2108 = vpop.permute.xlu0 %2107
    %2109 = vrot.lane.b32.xlu0 %v2086, 24
    %v2110 = vpop.permute.xlu0 %2109
    %v2113 = vsel %vm252, %v1820, %v2092
    %v2114 = vsel %vm252, %v1825, %v2094
    %v2115 = vsel %vm609, %v2113, %v2100
    %v2116 = vsel %vm609, %v2114, %v2102
    %v2117 = vsel %vm1074, %v2115, %v2108
    %v2118 = vsel %vm1074, %v2116, %v2110
    %v2119 = vlaneseq
    %v2120 = vshrl.u32 %v2119, 7
    %v2121 = vsub.s32 0, %v2120
    %v2122 = vrot.slane %v1286, %v2121
    %2127 = vrot.lane.b32.xlu0 %v241, 96
    %v2128 = vpop.permute.xlu0 %2127
    %2129 = vrot.lane.b32.xlu0 %v242, 96
    %v2130 = vpop.permute.xlu0 %2129
    %2131 = vrot.lane.b32.xlu0 %v243, 96
    %v2132 = vpop.permute.xlu0 %2131
    %2133 = vrot.lane.b32.xlu0 %v244, 96
    %v2134 = vpop.permute.xlu0 %2133
    %v2140 = vsel %vm127, %v2117, 0
    %v2143 = vsel %vm127, %v2118, 0
    %2145 = vmatprep.subr.mxu0 0.0
    %2146 = vmatpush1.msra.mxu0 %v2128
    %2147 = vmatprep.subr.mxu0 0.0
    %2148 = vmatpush1.msra.mxu0 %v2130
    %2149 = vmatprep.subr.mxu0 0.0
    %2150 = vmatpush1.msra.mxu0 %v2132
    %2151 = vmatprep.subr.mxu0 0.0
    %2152 = vmatpush1.msra.mxu0 %v2134
    %2153 = vmatprep.subr.mxu0 0.0
    %2154 = vmatpush1.msra.mxu0 0.0
    %2155 = vmatprep.subr.mxu0 0.0
    %2156 = vmatpush1.msra.mxu0 0.0
    %2157 = vmatprep.subr.mxu0 0.0
    %2158 = vmatpush1.msra.mxu0 0.0
    %2159 = vmatprep.subr.mxu0 0.0
    %2160 = vmatpush1.msra.mxu0 0.0
    %2161 = vmatprep.subr.mxu0 0.0
    %2162 = vmatpush1.msra.mxu0 0.0
    %2163 = vmatprep.subr.mxu0 0.0
    %2164 = vmatpush1.msra.mxu0 0.0
    %2165 = vmatprep.subr.mxu0 0.0
    %2166 = vmatpush1.msra.mxu0 0.0
    %2167 = vmatprep.subr.mxu0 0.0
    %2168 = vmatpush1.msra.mxu0 0.0
    %2169 = vmatprep.subr.mxu0 0.0
    %2170 = vmatpush1.msra.mxu0 0.0
    %2171 = vmatprep.subr.mxu0 0.0
    %2172 = vmatpush1.msra.mxu0 0.0
    %2173 = vmatprep.subr.mxu0 0.0
    %2174 = vmatpush1.msra.mxu0 0.0
    %2175 = vmatprep.subr.mxu0 0.0
    %2176 = vmatpush1.msra.mxu0 0.0
    %2177 = vmatprep.subr.mxu0 0.0
    %2178 = vmatpush1.msra.mxu0 0.0
    %2179 = vmatprep.subr.mxu0 0.0
    %2180 = vmatpush1.msra.mxu0 0.0
    %2181 = vmatprep.subr.mxu0 0.0
    %2182 = vmatpush1.msra.mxu0 0.0
    %2183 = vmatprep.subr.mxu0 0.0
    %2184 = vmatpush1.msra.mxu0 0.0
    %2185 = vmatprep.subr.mxu0 0.0
    %2186 = vmatpush1.msra.mxu0 0.0
    %2187 = vmatprep.subr.mxu0 0.0
    %2188 = vmatpush1.msra.mxu0 0.0
    %2189 = vmatprep.subr.mxu0 0.0
    %2190 = vmatpush1.msra.mxu0 0.0
    %2191 = vmatprep.subr.mxu0 0.0
    %2192 = vmatpush1.msra.mxu0 0.0
    %2193 = vmatprep.subr.mxu0 0.0
    %2194 = vmatpush1.msra.mxu0 0.0
    %2195 = vmatprep.subr.mxu0 0.0
    %2196 = vmatpush1.msra.mxu0 0.0
    %2197 = vmatprep.subr.mxu0 0.0
    %2198 = vmatpush1.msra.mxu0 0.0
    %2199 = vmatprep.subr.mxu0 0.0
    %2200 = vmatpush1.msra.mxu0 0.0
    %2201 = vmatprep.subr.mxu0 0.0
    %2202 = vmatpush1.msra.mxu0 0.0
    %2203 = vmatprep.subr.mxu0 0.0
    %2204 = vmatpush1.msra.mxu0 0.0
    %2205 = vmatprep.subr.mxu0 0.0
    %2206 = vmatpush1.msra.mxu0 0.0
    %2207 = vmatprep.subr.mxu0 0.0
    %2208 = vmatpush1.msra.mxu0 0.0
    %2209 = vmatprep.mubr.f32.mxu0 0.0
    %2210 = vmatmul.mubr.f32.gmra.mrb[0].mxu0 %v2140
    %v2211 = vpop.f32.mrb[0].mxu0
    %v2212 = vadd.f32 %v2122, %v2211
    %v2213 = vpop.f32.mrb[0].mxu0
    %2214 = vmatprep.mubr.f32.mxu0 0.0
    %2215 = vmatmul.mubr.f32.gmra.mrb[0].mxu0 %v2143
    %v2216 = vpop.f32.mrb[0].mxu0
    %v2217 = vadd.f32 %v2122, %v2216
    %v2218 = vpop.f32.mrb[0].mxu0
    %2219 = vdwg.mxu0
    %v2220 = vld [vmem:[%s6 + $0x4] sm:$0x1]
    %v2221 = vld [vmem:[%s6 + $0x5] sm:$0x1]
    %v2222 = vadd.f32 %v2212, %v1203
    %v2223 = vadd.f32 %v2217, %v1204
    %v2224 = vsel %vm127, %v2222, 0.0
    %2225 = vadd.xlane.f32.xlu0 %v2224
    %v2226 = vpop.xlane.xlu0 %2225
    %v2227 = vsel %vm127, %v2223, 0.0
    %2228 = vadd.xlane.f32.xlu0 %v2227
    %v2229 = vpop.xlane.xlu0 %2228
    %v2230 = vmul.f32 %v2226, %v1172
    %v2231 = vmul.f32 %v2229, %v1172
    %v2232 = vsub.f32 %v2222, %v2230
    %v2233 = vsub.f32 %v2223, %v2231
    %v2234 = vmul.f32 %v2232, %v2232
    %v2235 = vmul.f32 %v2233, %v2233
    %v2236 = vsel %vm127, %v2234, 0.0
    %2237 = vadd.xlane.f32.xlu0 %v2236
    %v2238 = vpop.xlane.xlu0 %2237
    %v2239 = vsel %vm127, %v2235, 0.0
    %2240 = vadd.xlane.f32.xlu0 %v2239
    %v2241 = vpop.xlane.xlu0 %2240
    %v2242 = vmul.f32 %v2238, %v1172
    %v2243 = vmul.f32 %v2241, %v1172
    %v2244 = vadd.f32 %v2242, 1e-05
    %v2245 = vadd.f32 %v2243, 1e-05
    %v2246 = vrsqrt.pop %v2244
    %v2247 = vrsqrt.pop %v2245
    %v2248 = vmul.f32 %v2232, %v2246
    %v2249 = vmul.f32 %v2233, %v2247
    %v2250 = vlaneseq
    %v2251 = vshrl.u32 %v2250, 7
    %v2252 = vsub.s32 0, %v2251
    %v2253 = vrot.slane %v2220, %v2252
    %v2254 = vmul.f32 %v2248, %v2253
    %v2255 = vmul.f32 %v2249, %v2253
    %v2256 = vlaneseq
    %v2257 = vshrl.u32 %v2256, 7
    %v2258 = vsub.s32 0, %v2257
    %v2259 = vrot.slane %v2221, %v2258
    %v2260 = vadd.f32 %v2254, %v2259
    %v2261 = vadd.f32 %v2255, %v2259
    %v2262 = vld [vmem:[#allocation11 + $0x10] sm:$0xff]
    %v2263 = vld [vmem:[#allocation11 + $0x38] sm:$0xff]
    %v2264 = vld [vmem:[#allocation11 + $0x60] sm:$0xff]
    %v2265 = vld [vmem:[#allocation11 + $0x88] sm:$0xff]
    %v2266 = vld [vmem:[%s6 + $0x8] sm:$0x1]
    %v2267 = vlaneseq
    %v2268 = vshrl.u32 %v2267, 7
    %v2269 = vsub.s32 0, %v2268
    %v2270 = vrot.slane %v2266, %v2269
    %v2272 = vsel %vm127, %v2260, 0
    %v2275 = vsel %vm127, %v2261, 0
    %2277 = vmatprep.subr.mxu0 0.0
    %2278 = vmatpush1.msra.mxu0 %v2262
    %2279 = vmatprep.subr.mxu0 0.0
    %2280 = vmatpush1.msra.mxu0 %v2263
    %2281 = vmatprep.subr.mxu0 0.0
    %2282 = vmatpush1.msra.mxu0 %v2264
    %2283 = vmatprep.subr.mxu0 0.0
    %2284 = vmatpush1.msra.mxu0 %v2265
    %2285 = vmatprep.subr.mxu0 0.0
    %2286 = vmatpush1.msra.mxu0 0.0
    %2287 = vmatprep.subr.mxu0 0.0
    %2288 = vmatpush1.msra.mxu0 0.0
    %2289 = vmatprep.subr.mxu0 0.0
    %2290 = vmatpush1.msra.mxu0 0.0
    %2291 = vmatprep.subr.mxu0 0.0
    %2292 = vmatpush1.msra.mxu0 0.0
    %2293 = vmatprep.subr.mxu0 0.0
    %2294 = vmatpush1.msra.mxu0 0.0
    %2295 = vmatprep.subr.mxu0 0.0
    %2296 = vmatpush1.msra.mxu0 0.0
    %2297 = vmatprep.subr.mxu0 0.0
    %2298 = vmatpush1.msra.mxu0 0.0
    %2299 = vmatprep.subr.mxu0 0.0
    %2300 = vmatpush1.msra.mxu0 0.0
    %2301 = vmatprep.subr.mxu0 0.0
    %2302 = vmatpush1.msra.mxu0 0.0
    %2303 = vmatprep.subr.mxu0 0.0
    %2304 = vmatpush1.msra.mxu0 0.0
    %2305 = vmatprep.subr.mxu0 0.0
    %2306 = vmatpush1.msra.mxu0 0.0
    %2307 = vmatprep.subr.mxu0 0.0
    %2308 = vmatpush1.msra.mxu0 0.0
    %2309 = vmatprep.subr.mxu0 0.0
    %2310 = vmatpush1.msra.mxu0 0.0
    %2311 = vmatprep.subr.mxu0 0.0
    %2312 = vmatpush1.msra.mxu0 0.0
    %2313 = vmatprep.subr.mxu0 0.0
    %2314 = vmatpush1.msra.mxu0 0.0
    %2315 = vmatprep.subr.mxu0 0.0
    %2316 = vmatpush1.msra.mxu0 0.0
    %2317 = vmatprep.subr.mxu0 0.0
    %2318 = vmatpush1.msra.mxu0 0.0
    %2319 = vmatprep.subr.mxu0 0.0
    %2320 = vmatpush1.msra.mxu0 0.0
    %2321 = vmatprep.subr.mxu0 0.0
    %2322 = vmatpush1.msra.mxu0 0.0
    %2323 = vmatprep.subr.mxu0 0.0
    %2324 = vmatpush1.msra.mxu0 0.0
    %2325 = vmatprep.subr.mxu0 0.0
    %2326 = vmatpush1.msra.mxu0 0.0
    %2327 = vmatprep.subr.mxu0 0.0
    %2328 = vmatpush1.msra.mxu0 0.0
    %2329 = vmatprep.subr.mxu0 0.0
    %2330 = vmatpush1.msra.mxu0 0.0
    %2331 = vmatprep.subr.mxu0 0.0
    %2332 = vmatpush1.msra.mxu0 0.0
    %2333 = vmatprep.subr.mxu0 0.0
    %2334 = vmatpush1.msra.mxu0 0.0
    %2335 = vmatprep.subr.mxu0 0.0
    %2336 = vmatpush1.msra.mxu0 0.0
    %2337 = vmatprep.subr.mxu0 0.0
    %2338 = vmatpush1.msra.mxu0 0.0
    %2339 = vmatprep.subr.mxu0 0.0
    %2340 = vmatpush1.msra.mxu0 0.0
    %2341 = vmatprep.mubr.f32.mxu0 0.0
    %2342 = vmatmul.mubr.f32.gmra.mrb[0].mxu0 %v2272
    %v2343 = vpop.f32.mrb[0].mxu0
    %v2344 = vadd.f32 %v2270, %v2343
    %v2345 = vpop.f32.mrb[0].mxu0
    %2346 = vmatprep.mubr.f32.mxu0 0.0
    %2347 = vmatmul.mubr.f32.gmra.mrb[0].mxu0 %v2275
    %v2348 = vpop.f32.mrb[0].mxu0
    %v2349 = vadd.f32 %v2270, %v2348
    %v2350 = vpop.f32.mrb[0].mxu0
    %2351 = vdwg.mxu0
    %v2352 = vmax.f32 %v2344, 0.0
    %v2353 = vmax.f32 %v2349, 0.0
    %v2354 = vld [vmem:[#allocation11 + $0x18] sm:$0xff]
    %v2355 = vld [vmem:[#allocation11 + $0x40] sm:$0xff]
    %v2356 = vld [vmem:[#allocation11 + $0x68] sm:$0xff]
    %v2357 = vld [vmem:[#allocation11 + $0x90] sm:$0xff]
    %v2358 = vld [vmem:[%s6 + $0x9] sm:$0x1]
    %v2359 = vlaneseq
    %v2360 = vshrl.u32 %v2359, 7
    %v2361 = vsub.s32 0, %v2360
    %v2362 = vrot.slane %v2358, %v2361
    %2363 = vmatprep.subr.mxu0 0.0
    %2364 = vmatpush1.xpose.msra.mxu0 %v2354
    %2365 = vmatprep.subr.mxu0 0.0
    %2366 = vmatpush1.xpose.msra.mxu0 %v2355
    %2367 = vmatprep.subr.mxu0 0.0
    %2368 = vmatpush1.xpose.msra.mxu0 %v2356
    %2369 = vmatprep.subr.mxu0 0.0
    %2370 = vmatpush1.xpose.msra.mxu0 %v2357
    %2371 = vmatprep.subr.mxu0 0.0
    %2372 = vmatpush1.xpose.msra.mxu0 0.0
    %2373 = vmatprep.subr.mxu0 0.0
    %2374 = vmatpush1.xpose.msra.mxu0 0.0
    %2375 = vmatprep.subr.mxu0 0.0
    %2376 = vmatpush1.xpose.msra.mxu0 0.0
    %2377 = vmatprep.subr.mxu0 0.0
    %2378 = vmatpush1.xpose.msra.mxu0 0.0
    %2379 = vmatprep.subr.mxu0 0.0
    %2380 = vmatpush1.xpose.msra.mxu0 0.0
    %2381 = vmatprep.subr.mxu0 0.0
    %2382 = vmatpush1.xpose.msra.mxu0 0.0
    %2383 = vmatprep.subr.mxu0 0.0
    %2384 = vmatpush1.xpose.msra.mxu0 0.0
    %2385 = vmatprep.subr.mxu0 0.0
    %2386 = vmatpush1.xpose.msra.mxu0 0.0
    %2387 = vmatprep.subr.mxu0 0.0
    %2388 = vmatpush1.xpose.msra.mxu0 0.0
    %2389 = vmatprep.subr.mxu0 0.0
    %2390 = vmatpush1.xpose.msra.mxu0 0.0
    %2391 = vmatprep.subr.mxu0 0.0
    %2392 = vmatpush1.xpose.msra.mxu0 0.0
    %2393 = vmatprep.subr.mxu0 0.0
    %2394 = vmatpush1.xpose.msra.mxu0 0.0
    %2395 = vmatprep.subr.mxu0 0.0
    %2396 = vmatpush1.xpose.msra.mxu0 0.0
    %2397 = vmatprep.subr.mxu0 0.0
    %2398 = vmatpush1.xpose.msra.mxu0 0.0
    %2399 = vmatprep.subr.mxu0 0.0
    %2400 = vmatpush1.xpose.msra.mxu0 0.0
    %2401 = vmatprep.subr.mxu0 0.0
    %2402 = vmatpush1.xpose.msra.mxu0 0.0
    %2403 = vmatprep.subr.mxu0 0.0
    %2404 = vmatpush1.xpose.msra.mxu0 0.0
    %2405 = vmatprep.subr.mxu0 0.0
    %2406 = vmatpush1.xpose.msra.mxu0 0.0
    %2407 = vmatprep.subr.mxu0 0.0
    %2408 = vmatpush1.xpose.msra.mxu0 0.0
    %2409 = vmatprep.subr.mxu0 0.0
    %2410 = vmatpush1.xpose.msra.mxu0 0.0
    %2411 = vmatprep.subr.mxu0 0.0
    %2412 = vmatpush1.xpose.msra.mxu0 0.0
    %2413 = vmatprep.subr.mxu0 0.0
    %2414 = vmatpush1.xpose.msra.mxu0 0.0
    %2415 = vmatprep.subr.mxu0 0.0
    %2416 = vmatpush1.xpose.msra.mxu0 0.0
    %2417 = vmatprep.subr.mxu0 0.0
    %2418 = vmatpush1.xpose.msra.mxu0 0.0
    %2419 = vmatprep.subr.mxu0 0.0
    %2420 = vmatpush1.xpose.msra.mxu0 0.0
    %2421 = vmatprep.subr.mxu0 0.0
    %2422 = vmatpush1.xpose.msra.mxu0 0.0
    %2423 = vmatprep.subr.mxu0 0.0
    %2424 = vmatpush1.xpose.msra.mxu0 0.0
    %2425 = vmatprep.subr.mxu0 0.0
    %2426 = vmatpush1.xpose.msra.mxu0 0.0
    %2427 = vmatprep.mubr.f32.mxu0 0.0
    %2428 = vmatmul.mubr.f32.gmra.mrb[0].mxu0 %v2352
    %v2429 = vpop.f32.mrb[0].mxu0
    %v2430 = vadd.f32 %v2362, %v2429
    %v2431 = vpop.f32.mrb[0].mxu0
    %2432 = vmatprep.mubr.f32.mxu0 0.0
    %2433 = vmatmul.mubr.f32.gmra.mrb[0].mxu0 %v2353
    %v2434 = vpop.f32.mrb[0].mxu0
    %v2435 = vadd.f32 %v2362, %v2434
    %v2436 = vpop.f32.mrb[0].mxu0
    %2437 = vdwg.mxu0
    %v2438 = vld [vmem:[%s6 + $0x6] sm:$0x1]
    %v2439 = vld [vmem:[%s6 + $0x7] sm:$0x1]
    %v2440 = vadd.f32 %v2430, %v2260
    %v2441 = vadd.f32 %v2435, %v2261
    %v2442 = vsel %vm127, %v2440, 0.0
    %2443 = vadd.xlane.f32.xlu0 %v2442
    %v2444 = vpop.xlane.xlu0 %2443
    %v2445 = vsel %vm127, %v2441, 0.0
    %2446 = vadd.xlane.f32.xlu0 %v2445
    %v2447 = vpop.xlane.xlu0 %2446
    %v2448 = vmul.f32 %v2444, %v1172
    %v2449 = vmul.f32 %v2447, %v1172
    %v2450 = vsub.f32 %v2440, %v2448
    %v2451 = vsub.f32 %v2441, %v2449
    %v2452 = vmul.f32 %v2450, %v2450
    %v2453 = vmul.f32 %v2451, %v2451
    %v2454 = vsel %vm127, %v2452, 0.0
    %2455 = vadd.xlane.f32.xlu0 %v2454
    %v2456 = vpop.xlane.xlu0 %2455
    %v2457 = vsel %vm127, %v2453, 0.0
    %2458 = vadd.xlane.f32.xlu0 %v2457
    %v2459 = vpop.xlane.xlu0 %2458
    %v2460 = vmul.f32 %v2456, %v1172
    %v2461 = vmul.f32 %v2459, %v1172
    %v2462 = vadd.f32 %v2460, 1e-05
    %v2463 = vadd.f32 %v2461, 1e-05
    %v2464 = vrsqrt.pop %v2462
    %v2465 = vrsqrt.pop %v2463
    %v2466 = vmul.f32 %v2450, %v2464
    %v2467 = vmul.f32 %v2451, %v2465
    %v2468 = vlaneseq
    %v2469 = vshrl.u32 %v2468, 7
    %v2470 = vsub.s32 0, %v2469
    %v2471 = vrot.slane %v2438, %v2470
    %v2472 = vmul.f32 %v2466, %v2471
    %v2473 = vmul.f32 %v2467, %v2471
    %v2474 = vlaneseq
    %v2475 = vshrl.u32 %v2474, 7
    %v2476 = vsub.s32 0, %v2475
    %v2477 = vrot.slane %v2439, %v2476
    %v2478 = vadd.f32 %v2472, %v2477
    %v2479 = vadd.f32 %v2473, %v2477
    %2480 = vst.msk [vmem:[#allocation13] sm:$0xff] %vm127, %v2478
    %2481 = vst.msk [vmem:[#allocation13 + $0x8] sm:$0xff] %vm127, %v2479
    // Predicated region
    $region54: #{tpu_custom_call.1} parent=1 // pred_check
      _
    $region55: #{tpu_custom_call.1} parent=1 // pred_check_branch
      %2483 = sbr.rel (0) target = $region57
    $region56: #{tpu_custom_call.1} parent=1 // pred_region
      %s2485 = ssub.s32 256, 256
      %2486 = vsyncadd [#allocation4], %s2485
      %s2487 = sshll.u32 [#allocation13], 4
      %s2488 = int_to_ptr.vmem [resolvable:$true] %s2487
      %2493 = dma.vmem_to_hbm [thread:$0]  %s2488, 256, %s7, [#allocation4], 128, 128, 8
    $region57: #{tpu_custom_call.1} parent=1 // pred_fallthru
      _
    // Predicated region
    $region58: #{tpu_custom_call.1} parent=1 // pred_check
      _
    $region59: #{tpu_custom_call.1} parent=1 // pred_check_branch
      %2495 = sbr.rel (0) target = $region61
    $region60: #{tpu_custom_call.1} parent=1 // pred_region
      %2496 = dma.done [#allocation4], 256
    $region61: #{tpu_custom_call.1} parent=1 // pred_fallthru
      _
    %2497 = vsyncpa [#allocation3], 1
    %2498 = vsyncpa [#allocation6], 1
    %2499 = vsyncpa [#allocation9], 1
    %2500 = vsyncpa [#allocation12], 1
    %2501 = vsyncpa [#allocation4], 1

</llo_original>
